<compile_context>
chip_gen: v6e
topology: v6e:2x2x1
jax: 0.10.0
libtpu: 0.0.40
codegen_flags: <defaults>
</compile_context>

<pallas_src>
import functools

import jax
import jax.numpy as jnp
from jax.experimental import pallas as pl
from jax.experimental.pallas import tpu as pltpu


def _round_up(x, m):
    return ((x + m - 1) // m) * m


# --------------------------------------------------------------------------
# Kernel
# --------------------------------------------------------------------------
def _vae_kernel(x_ref, eps_ref, w_ref, b_ref, out_ref, *, D, E, WR):
    """One batch tile of the full VAE forward.

    x_ref:   (TB, D)           input tile
    eps_ref: (TB, E)           pre-sampled N(0,1) noise tile
    w_ref:   (6*WR, WC)        packed, zero-padded weight slab (row-stride WR)
    b_ref:   (8, WC)           packed, zero-padded bias slab (one row / layer)
    out_ref: (TB, D + 2E)      [recon | mu | log_var]
    """

    def W(i, fi, fo):
        # static, sublane-aligned (WR is a multiple of 8) window of the slab
        return w_ref[i * WR:i * WR + fi, 0:fo]

    def Bv(i, fo):
        return b_ref[i:i + 1, 0:fo]

    x = x_ref[...]

    # ---- encoder: Linear(D,64) -> ReLU -> Linear(64,32) -> ReLU
    h = jnp.dot(x, W(0, D, 64), preferred_element_type=jnp.float32) + Bv(0, 64)
    h = jnp.maximum(h, 0.0)
    h = jnp.dot(h, W(1, 64, 32), preferred_element_type=jnp.float32) + Bv(1, 32)
    h = jnp.maximum(h, 0.0)

    # ---- folded [encoder.4 ; fc_mu | fc_var] : one (32, 2E) matmul
    mv = jnp.dot(h, W(2, 32, 2 * E), preferred_element_type=jnp.float32) + Bv(2, 2 * E)
    mu = mv[:, :E]
    log_var = mv[:, E:]

    # ---- reparameterize: z = mu + eps * exp(0.5 * log_var)   (f32, EUP)
    z = mu + eps_ref[...] * jnp.exp(0.5 * log_var)

    # ---- decoder: Linear(E,32) -> ReLU -> Linear(32,64) -> ReLU -> Linear(64,D)
    d = jnp.dot(z, W(3, E, 32), preferred_element_type=jnp.float32) + Bv(3, 32)
    d = jnp.maximum(d, 0.0)
    d = jnp.dot(d, W(4, 32, 64), preferred_element_type=jnp.float32) + Bv(4, 64)
    d = jnp.maximum(d, 0.0)
    recon = jnp.dot(d, W(5, 64, D), preferred_element_type=jnp.float32) + Bv(5, D)

    # single lane-dense output slab: [recon | mu | log_var]
    out_ref[...] = jnp.concatenate([recon, mu, log_var], axis=-1)


# --------------------------------------------------------------------------
# Host-side wrapper
# --------------------------------------------------------------------------
def vae_forward(x, eps, w_slab, b_slab, *, input_dim, encoding_dim, wr, tb=128):
    """Full VAE forward via one pallas_call, gridded over the batch."""
    D, E = input_dim, encoding_dim
    B = x.shape[0]

    tb = min(tb, _round_up(B, 8))          # batch tile, multiple of 8 sublanes
    pB = _round_up(B, tb)
    if pB != B:
        x = jnp.pad(x, ((0, pB - B), (0, 0)))
        eps = jnp.pad(eps, ((0, pB - B), (0, 0)))

    out_w = D + 2 * E
    kernel = functools.partial(_vae_kernel, D=D, E=E, WR=wr)

    flops = 2 * pB * (D * 64 + 64 * 32 + 32 * 2 * E + E * 32 + 32 * 64 + 64 * D)
    bytes_accessed = 4 * (pB * (D + E + out_w) + w_slab.size + b_slab.size)
    cost = pl.CostEstimate(flops=flops,
                           transcendentals=pB * E,
                           bytes_accessed=bytes_accessed)

    out = pl.pallas_call(
        kernel,
        out_shape=jax.ShapeDtypeStruct((pB, out_w), jnp.float32),
        grid=(pB // tb,),
        in_specs=[
            pl.BlockSpec((tb, D), lambda i: (i, 0)),          # x tile
            pl.BlockSpec((tb, E), lambda i: (i, 0)),          # eps tile
            pl.BlockSpec(w_slab.shape, lambda i: (0, 0)),     # weights, resident
            pl.BlockSpec(b_slab.shape, lambda i: (0, 0)),     # biases, resident
        ],
        out_specs=pl.BlockSpec((tb, out_w), lambda i: (i, 0)),
        compiler_params=pltpu.CompilerParams(
            dimension_semantics=("parallel",)),
        cost_estimate=cost,
    )(x, eps, w_slab, b_slab)

    recon = out[:B, :D]
    mu = out[:B, D:D + E]
    log_var = out[:B, D + E:]
    return recon, mu, log_var


# --------------------------------------------------------------------------
# Parameter init (PyTorch-Linear style) and packing
# --------------------------------------------------------------------------
def init_params(key, input_dim, encoding_dim):
    """Weights as (in_features, out_features); biases as (1, out_features)."""
    layer_dims = [
        (input_dim, 64),               # encoder.0
        (64, 32),                      # encoder.2
        (32, encoding_dim),            # encoder.4
        (encoding_dim, encoding_dim),  # fc_mu
        (encoding_dim, encoding_dim),  # fc_var
        (encoding_dim, 32),            # decoder.0
        (32, 64),                      # decoder.2
        (64, input_dim),               # decoder.4
    ]
    params = []
    for fan_in, fan_out in layer_dims:
        key, wk, bk = jax.random.split(key, 3)
        bound = 1.0 / jnp.sqrt(jnp.float32(fan_in))
        w = jax.random.uniform(wk, (fan_in, fan_out), jnp.float32, -bound, bound)
        b = jax.random.uniform(bk, (1, fan_out), jnp.float32, -bound, bound)
        params.extend([w, b])
    return params


def pack_params(params, input_dim, encoding_dim):
    """Fold encoder.4 into fc_mu/fc_var and pack everything into two slabs.

    Returns (w_slab, b_slab, WR) where WR is the per-layer row stride of the
    weight slab.
    """
    (ew1, eb1, ew2, eb2, ew3, eb3, mw, mb, vw, vb,
     dw1, db1, dw2, db2, dw3, db3) = params
    hp = jax.lax.Precision.HIGHEST

    mv_w = jnp.concatenate([mw, vw], axis=1)                 # (E, 2E)
    mv_b = jnp.concatenate([mb, vb], axis=1)                 # (1, 2E)
    w_mv = jnp.dot(ew3, mv_w, precision=hp)                  # (32, 2E)
    b_mv = jnp.dot(eb3, mv_w, precision=hp) + mv_b           # (1, 2E)

    weights = [ew1, ew2, w_mv, dw1, dw2, dw3]
    biases = [eb1, eb2, b_mv, db1, db2, db3]

    WR = _round_up(max(w.shape[0] for w in weights), 8)
    WC = _round_up(max(max(w.shape[1] for w in weights),
                       max(b.shape[1] for b in biases)), 128)
    BR = _round_up(len(biases), 8)

    w_slab = jnp.zeros((len(weights) * WR, WC), jnp.float32)
    for i, w in enumerate(weights):
        w_slab = w_slab.at[i * WR:i * WR + w.shape[0], :w.shape[1]].set(w)

    b_slab = jnp.zeros((BR, WC), jnp.float32)
    for i, b in enumerate(biases):
        b_slab = b_slab.at[i, :b.shape[1]].set(b[0])

    return w_slab, b_slab, WR


# --------------------------------------------------------------------------
# Pure-JAX reference (unfolded, original 16 params)
# --------------------------------------------------------------------------
def vae_reference(x, eps, params):
    (ew1, eb1, ew2, eb2, ew3, eb3, mw, mb, vw, vb,
     dw1, db1, dw2, db2, dw3, db3) = params
    h = jnp.maximum(x @ ew1 + eb1, 0.0)
    h = jnp.maximum(h @ ew2 + eb2, 0.0)
    h = h @ ew3 + eb3
    mu = h @ mw + mb
    log_var = h @ vw + vb
    z = mu + eps * jnp.exp(0.5 * log_var)
    d = jnp.maximum(z @ dw1 + db1, 0.0)
    d = jnp.maximum(d @ dw2 + db2, 0.0)
    recon = d @ dw3 + db3
    return recon, mu, log_var


if __name__ == "__main__":
    B = 256
    INPUT_DIM = 32
    ENCODING_DIM = 8
    TB = 128

    key = jax.random.PRNGKey(0)
    key, xk, ek, pk = jax.random.split(key, 4)

    x = jax.random.normal(xk, (B, INPUT_DIM), jnp.float32)
    eps = jax.random.normal(ek, (B, ENCODING_DIM), jnp.float32)
    params = init_params(pk, INPUT_DIM, ENCODING_DIM)
    w_slab, b_slab, wr = pack_params(params, INPUT_DIM, ENCODING_DIM)

    fwd = jax.jit(functools.partial(
        vae_forward, input_dim=INPUT_DIM, encoding_dim=ENCODING_DIM,
        wr=wr, tb=TB))

    recon, mu, log_var = jax.block_until_ready(fwd(x, eps, w_slab, b_slab))

    # sanity-check against pure-JAX reference
    r_ref, mu_ref, lv_ref = vae_reference(x, eps, params)
    assert recon.shape == (B, INPUT_DIM)
    assert mu.shape == (B, ENCODING_DIM) and log_var.shape == (B, ENCODING_DIM)
    assert jnp.allclose(recon, r_ref, atol=2e-4, rtol=2e-4)
    assert jnp.allclose(mu, mu_ref, atol=2e-4, rtol=2e-4)
    assert jnp.allclose(log_var, lv_ref, atol=2e-4, rtol=2e-4)

    print("KERNEL_OK")
</pallas_src>

<mosaic_0001>
module attributes {stable_mosaic.version = 11 : i64} {
  func.func @_vae_kernel(%arg0: i32, %arg1: memref<128x32xf32, #tpu.memory_space<vmem>>, %arg2: memref<128x8xf32, #tpu.memory_space<vmem>>, %arg3: memref<384x128xf32, #tpu.memory_space<vmem>>, %arg4: memref<8x128xf32, #tpu.memory_space<vmem>>, %arg5: memref<128x48xf32, #tpu.memory_space<vmem>>) attributes {dimension_semantics = [#tpu.dimension_semantics<parallel>], iteration_bounds = array<i64: 2>, scalar_prefetch = 0 : i64, scratch_operands = 0 : i64, tpu.core_type = #tpu.core_type<tc>, window_params = [{transform_indices = @transform_0, window_bounds = array<i64: 128, 32>}, {transform_indices = @transform_1, window_bounds = array<i64: 128, 8>}, {pipeline_mode = #tpu.pipeline_mode<synchronous>, transform_indices = @transform_2, window_bounds = array<i64: 384, 128>}, {pipeline_mode = #tpu.pipeline_mode<synchronous>, transform_indices = @transform_3, window_bounds = array<i64: 8, 128>}, {transform_indices = @transform_4, window_bounds = array<i64: 128, 48>}]} {
    %c0 = arith.constant 0 : index
    %c0_0 = arith.constant 0 : index
    %0 = vector.load %arg1[%c0, %c0_0] : memref<128x32xf32, #tpu.memory_space<vmem>>, vector<128x32xf32>
    %c0_1 = arith.constant 0 : index
    %c0_2 = arith.constant 0 : index
    %1 = vector.load %arg3[%c0_1, %c0_2] : memref<384x128xf32, #tpu.memory_space<vmem>>, vector<32x64xf32>
    %cst = arith.constant dense<0.000000e+00> : vector<128x64xf32>
    %2 = tpu.matmul %0, %1, %cst {dimension_numbers = #tpu.dot_dimension_numbers<[1], [0], [0], [1], [0, 0, 1, 1], [], []>} : vector<128x32xf32>, vector<32x64xf32>, vector<128x64xf32> -> vector<128x64xf32>
    %c0_3 = arith.constant 0 : index
    %c0_4 = arith.constant 0 : index
    %3 = vector.load %arg4[%c0_3, %c0_4] : memref<8x128xf32, #tpu.memory_space<vmem>>, vector<1x64xf32>
    %4 = vector.broadcast %3 : vector<1x64xf32> to vector<128x64xf32>
    %5 = arith.addf %2, %4 : vector<128x64xf32>
    %cst_5 = arith.constant 0.000000e+00 : f32
    %6 = vector.broadcast %cst_5 : f32 to vector<128x64xf32>
    %7 = arith.maximumf %5, %6 : vector<128x64xf32>
    %c64 = arith.constant 64 : index
    %c0_6 = arith.constant 0 : index
    %8 = vector.load %arg3[%c64, %c0_6] : memref<384x128xf32, #tpu.memory_space<vmem>>, vector<64x32xf32>
    %cst_7 = arith.constant dense<0.000000e+00> : vector<128x32xf32>
    %9 = tpu.matmul %7, %8, %cst_7 {dimension_numbers = #tpu.dot_dimension_numbers<[1], [0], [0], [1], [0, 0, 1, 1], [], []>} : vector<128x64xf32>, vector<64x32xf32>, vector<128x32xf32> -> vector<128x32xf32>
    %c1 = arith.constant 1 : index
    %c0_8 = arith.constant 0 : index
    %10 = vector.load %arg4[%c1, %c0_8] : memref<8x128xf32, #tpu.memory_space<vmem>>, vector<1x32xf32>
    %11 = vector.broadcast %10 : vector<1x32xf32> to vector<128x32xf32>
    %12 = arith.addf %9, %11 : vector<128x32xf32>
    %cst_9 = arith.constant 0.000000e+00 : f32
    %13 = vector.broadcast %cst_9 : f32 to vector<128x32xf32>
    %14 = arith.maximumf %12, %13 : vector<128x32xf32>
    %c128 = arith.constant 128 : index
    %c0_10 = arith.constant 0 : index
    %15 = vector.load %arg3[%c128, %c0_10] : memref<384x128xf32, #tpu.memory_space<vmem>>, vector<32x16xf32>
    %cst_11 = arith.constant dense<0.000000e+00> : vector<128x16xf32>
    %16 = tpu.matmul %14, %15, %cst_11 {dimension_numbers = #tpu.dot_dimension_numbers<[1], [0], [0], [1], [0, 0, 1, 1], [], []>} : vector<128x32xf32>, vector<32x16xf32>, vector<128x16xf32> -> vector<128x16xf32>
    %c2 = arith.constant 2 : index
    %c0_12 = arith.constant 0 : index
    %17 = vector.load %arg4[%c2, %c0_12] : memref<8x128xf32, #tpu.memory_space<vmem>>, vector<1x16xf32>
    %18 = vector.broadcast %17 : vector<1x16xf32> to vector<128x16xf32>
    %19 = arith.addf %16, %18 : vector<128x16xf32>
    %20 = vector.extract_strided_slice %19 {offsets = [0, 0], sizes = [128, 8], strides = [1, 1]} : vector<128x16xf32> to vector<128x8xf32>
    %21 = vector.extract_strided_slice %19 {offsets = [0, 8], sizes = [128, 8], strides = [1, 1]} : vector<128x16xf32> to vector<128x8xf32>
    %c0_13 = arith.constant 0 : index
    %c0_14 = arith.constant 0 : index
    %22 = vector.load %arg2[%c0_13, %c0_14] : memref<128x8xf32, #tpu.memory_space<vmem>>, vector<128x8xf32>
    %cst_15 = arith.constant 5.000000e-01 : f32
    %23 = vector.broadcast %cst_15 : f32 to vector<128x8xf32>
    %24 = arith.mulf %23, %21 : vector<128x8xf32>
    %25 = math.exp %24 : vector<128x8xf32>
    %26 = arith.mulf %22, %25 : vector<128x8xf32>
    %27 = arith.addf %20, %26 : vector<128x8xf32>
    %c192 = arith.constant 192 : index
    %c0_16 = arith.constant 0 : index
    %28 = vector.load %arg3[%c192, %c0_16] : memref<384x128xf32, #tpu.memory_space<vmem>>, vector<8x32xf32>
    %cst_17 = arith.constant dense<0.000000e+00> : vector<128x32xf32>
    %29 = tpu.matmul %27, %28, %cst_17 {dimension_numbers = #tpu.dot_dimension_numbers<[1], [0], [0], [1], [0, 0, 1, 1], [], []>} : vector<128x8xf32>, vector<8x32xf32>, vector<128x32xf32> -> vector<128x32xf32>
    %c3 = arith.constant 3 : index
    %c0_18 = arith.constant 0 : index
    %30 = vector.load %arg4[%c3, %c0_18] : memref<8x128xf32, #tpu.memory_space<vmem>>, vector<1x32xf32>
    %31 = vector.broadcast %30 : vector<1x32xf32> to vector<128x32xf32>
    %32 = arith.addf %29, %31 : vector<128x32xf32>
    %cst_19 = arith.constant 0.000000e+00 : f32
    %33 = vector.broadcast %cst_19 : f32 to vector<128x32xf32>
    %34 = arith.maximumf %32, %33 : vector<128x32xf32>
    %c256 = arith.constant 256 : index
    %c0_20 = arith.constant 0 : index
    %35 = vector.load %arg3[%c256, %c0_20] : memref<384x128xf32, #tpu.memory_space<vmem>>, vector<32x64xf32>
    %cst_21 = arith.constant dense<0.000000e+00> : vector<128x64xf32>
    %36 = tpu.matmul %34, %35, %cst_21 {dimension_numbers = #tpu.dot_dimension_numbers<[1], [0], [0], [1], [0, 0, 1, 1], [], []>} : vector<128x32xf32>, vector<32x64xf32>, vector<128x64xf32> -> vector<128x64xf32>
    %c4 = arith.constant 4 : index
    %c0_22 = arith.constant 0 : index
    %37 = vector.load %arg4[%c4, %c0_22] : memref<8x128xf32, #tpu.memory_space<vmem>>, vector<1x64xf32>
    %38 = vector.broadcast %37 : vector<1x64xf32> to vector<128x64xf32>
    %39 = arith.addf %36, %38 : vector<128x64xf32>
    %cst_23 = arith.constant 0.000000e+00 : f32
    %40 = vector.broadcast %cst_23 : f32 to vector<128x64xf32>
    %41 = arith.maximumf %39, %40 : vector<128x64xf32>
    %c320 = arith.constant 320 : index
    %c0_24 = arith.constant 0 : index
    %42 = vector.load %arg3[%c320, %c0_24] : memref<384x128xf32, #tpu.memory_space<vmem>>, vector<64x32xf32>
    %cst_25 = arith.constant dense<0.000000e+00> : vector<128x32xf32>
    %43 = tpu.matmul %41, %42, %cst_25 {dimension_numbers = #tpu.dot_dimension_numbers<[1], [0], [0], [1], [0, 0, 1, 1], [], []>} : vector<128x64xf32>, vector<64x32xf32>, vector<128x32xf32> -> vector<128x32xf32>
    %c5 = arith.constant 5 : index
    %c0_26 = arith.constant 0 : index
    %44 = vector.load %arg4[%c5, %c0_26] : memref<8x128xf32, #tpu.memory_space<vmem>>, vector<1x32xf32>
    %45 = vector.broadcast %44 : vector<1x32xf32> to vector<128x32xf32>
    %46 = arith.addf %43, %45 : vector<128x32xf32>
    %47 = tpu.concatenate %46, %20, %21 in 1 : vector<128x32xf32>, vector<128x8xf32>, vector<128x8xf32> -> vector<128x48xf32>
    %c0_27 = arith.constant 0 : index
    %c0_28 = arith.constant 0 : index
    %48 = vector.load %arg5[%c0_27, %c0_28] : memref<128x48xf32, #tpu.memory_space<vmem>>, vector<128x48xf32>
    tpu.vector_store %arg5[%c0_27, %c0_28], %47 {strides = array<i32>} : memref<128x48xf32, #tpu.memory_space<vmem>>, vector<128x48xf32>,
    return
  }
  func.func @transform_0(%arg0: i32) -> (i32, i32) {
    %c0_i32 = arith.constant 0 : i32
    %c0_i32_0 = arith.constant 0 : i32
    return %arg0, %c0_i32 : i32, i32
  }
  func.func @transform_1(%arg0: i32) -> (i32, i32) {
    %c0_i32 = arith.constant 0 : i32
    %c0_i32_0 = arith.constant 0 : i32
    return %arg0, %c0_i32 : i32, i32
  }
  func.func @transform_2(%arg0: i32) -> (i32, i32) {
    %c0_i32 = arith.constant 0 : i32
    %c0_i32_0 = arith.constant 0 : i32
    %c0_i32_1 = arith.constant 0 : i32
    return %c0_i32, %c0_i32_0 : i32, i32
  }
  func.func @transform_3(%arg0: i32) -> (i32, i32) {
    %c0_i32 = arith.constant 0 : i32
    %c0_i32_0 = arith.constant 0 : i32
    %c0_i32_1 = arith.constant 0 : i32
    return %c0_i32, %c0_i32_0 : i32, i32
  }
  func.func @transform_4(%arg0: i32) -> (i32, i32) {
    %c0_i32 = arith.constant 0 : i32
    %c0_i32_0 = arith.constant 0 : i32
    return %arg0, %c0_i32 : i32, i32
  }
}

</mosaic_0001>

<llo_original>
// kernel: vae_forward.1
$region0: #{vae_forward.1}
  #allocation0 [shape = 'u32[]', space=smem, size = 0x4, offset = 0x4, fixed_abs, tag = 'smem constant byte address 0x4 - core index']
  #allocation1 [shape = 'u32[144,128]{1,0:T(1,128)}', space=vmem, size = 0x12000, scoped, tag = 'internal scratch']
  %s0 = inlined_call_operand.vmem [shape: f32[256,32], index: 0, kind: input, shape index: {}]
  %s1 = inlined_call_operand.vmem [shape: f32[256,8], index: 1, kind: input, shape index: {}]
  %s2 = inlined_call_operand.vmem [shape: f32[384,128], index: 2, kind: input, shape index: {}]
  %s3 = inlined_call_operand.vmem [shape: f32[8,128], index: 3, kind: input, shape index: {}]
  %s4 = inlined_call_operand.vmem [shape: f32[256,48], index: 4, kind: output, shape index: {}]
  %s5 = sld [smem:[#allocation0]]
  $region49: #{vae_forward.1} parent=0
    _
  %s7 = ssub.s32 1, %s5
  %s8 = scalar_select 0, %s7, %s5
  loop: start=0, step=1, limit=4
  $region2: #{vae_forward.1} parent=0 // loop_pre_header
    _
  $region3: #{vae_forward.1} parent=0 // loop_header
    %s10 = sphi 0, %s14
    %p11 = scmp.ge.s32.totalorder %s10, 4
    %s20 = sphi 0, %s22
    %s23 = sphi 0, %s20
    %s24 = sphi 0, %s23
    %s40 = sphi 0, %s24
    %s46 = sphi 0, %s48
    %s49 = sphi 0, %s46
    %s50 = sphi 0, %s49
    %s66 = sphi 0, %s50
    %s70 = sphi 0, %s70
    %s72 = sphi 0, %s70
    %s73 = sphi 0, %s72
    %s87 = sphi 0, %s73
    %s91 = sphi 0, %s91
    %s93 = sphi 0, %s91
    %s94 = sphi 0, %s93
    %s108 = sphi 0, %s94
    %s114 = sphi 0, %s116
    %s117 = sphi 0, %s114
    %s118 = sphi 0, %s117
    %s134 = sphi 0, %s118
  $region4: #{vae_forward.1} parent=0 // loop_header_branch
    %13 = sbr.rel (%p11) target = $region8
  $region5: #{vae_forward.1} parent=0 // loop_body
    %s15 = ssub.s32 %s10, 1
    %s16 = ssub.s32 %s10, 2
    %s17 = sadd.s32 %s10, 1
    %s18 = ssub.s32 %s10, %s17
    %p19 = scmp.eq.s32.totalorder %s18, 0
    %s21 = sadd.s32 %s20, 1
    %s22 = scalar_select %p19, %s20, %s21
    %p25 = pneg %p19
    %p26 = scmp.eq.s32.totalorder %s10, 1
    %p27 = por %p25, %p26
    %p28 = scmp.ne.s32.totalorder %s20, %s23
    %p29 = scmp.eq.s32.totalorder %s10, 0
    %p30 = por %p28, %p29
    %p31 = scmp.ne.s32.totalorder %s20, %s23
    %p32 = scmp.eq.s32.totalorder %s15, 1
    %p33 = por %p31, %p32
    %p34 = scmp.ne.s32.totalorder %s23, %s24
    %p35 = scmp.eq.s32.totalorder %s15, 0
    %p36 = por %p34, %p35
    %p37 = scmp.ne.s32.totalorder %s23, %s24
    %p38 = scmp.eq.s32.totalorder %s16, 1
    %p39 = por %p37, %p38
    %p41 = scmp.ne.s32.totalorder %s24, %s40
    %p42 = scmp.eq.s32.totalorder %s16, 0
    %p43 = por %p41, %p42
    %s44 = ssub.s32 %s10, %s17
    %p45 = scmp.eq.s32.totalorder %s44, 0
    %s47 = sadd.s32 %s46, 1
    %s48 = scalar_select %p45, %s46, %s47
    %p51 = pneg %p45
    %p52 = scmp.eq.s32.totalorder %s10, 1
    %p53 = por %p51, %p52
    %p54 = scmp.ne.s32.totalorder %s46, %s49
    %p55 = scmp.eq.s32.totalorder %s10, 0
    %p56 = por %p54, %p55
    %p57 = scmp.ne.s32.totalorder %s46, %s49
    %p58 = scmp.eq.s32.totalorder %s15, 1
    %p59 = por %p57, %p58
    %p60 = scmp.ne.s32.totalorder %s49, %s50
    %p61 = scmp.eq.s32.totalorder %s15, 0
    %p62 = por %p60, %p61
    %p63 = scmp.ne.s32.totalorder %s49, %s50
    %p64 = scmp.eq.s32.totalorder %s16, 1
    %p65 = por %p63, %p64
    %p67 = scmp.ne.s32.totalorder %s50, %s66
    %p68 = scmp.eq.s32.totalorder %s16, 0
    %p69 = por %p67, %p68
    %s71 = sadd.s32 %s70, 1
    %p74 = scmp.eq.s32.totalorder %s10, 1
    %p75 = scmp.ne.s32.totalorder %s70, %s72
    %p76 = scmp.eq.s32.totalorder %s10, 0
    %p77 = por %p75, %p76
    %p78 = scmp.ne.s32.totalorder %s70, %s72
    %p79 = scmp.eq.s32.totalorder %s15, 1
    %p80 = por %p78, %p79
    %p81 = scmp.ne.s32.totalorder %s72, %s73
    %p82 = scmp.eq.s32.totalorder %s15, 0
    %p83 = por %p81, %p82
    %p84 = scmp.ne.s32.totalorder %s72, %s73
    %p85 = scmp.eq.s32.totalorder %s16, 1
    %p86 = por %p84, %p85
    %p88 = scmp.ne.s32.totalorder %s73, %s87
    %p89 = scmp.eq.s32.totalorder %s16, 0
    %p90 = por %p88, %p89
    %s92 = sadd.s32 %s91, 1
    %p95 = scmp.eq.s32.totalorder %s10, 1
    %p96 = scmp.ne.s32.totalorder %s91, %s93
    %p97 = scmp.eq.s32.totalorder %s10, 0
    %p98 = por %p96, %p97
    %p99 = scmp.ne.s32.totalorder %s91, %s93
    %p100 = scmp.eq.s32.totalorder %s15, 1
    %p101 = por %p99, %p100
    %p102 = scmp.ne.s32.totalorder %s93, %s94
    %p103 = scmp.eq.s32.totalorder %s15, 0
    %p104 = por %p102, %p103
    %p105 = scmp.ne.s32.totalorder %s93, %s94
    %p106 = scmp.eq.s32.totalorder %s16, 1
    %p107 = por %p105, %p106
    %p109 = scmp.ne.s32.totalorder %s94, %s108
    %p110 = scmp.eq.s32.totalorder %s16, 0
    %p111 = por %p109, %p110
    %s112 = ssub.s32 %s10, %s17
    %p113 = scmp.eq.s32.totalorder %s112, 0
    %s115 = sadd.s32 %s114, 1
    %s116 = scalar_select %p113, %s114, %s115
    %p119 = pneg %p113
    %p120 = scmp.eq.s32.totalorder %s10, 1
    %p121 = por %p119, %p120
    %p122 = scmp.ne.s32.totalorder %s114, %s117
    %p123 = scmp.eq.s32.totalorder %s10, 0
    %p124 = por %p122, %p123
    %p125 = scmp.ne.s32.totalorder %s114, %s117
    %p126 = scmp.eq.s32.totalorder %s15, 1
    %p127 = por %p125, %p126
    %p128 = scmp.ne.s32.totalorder %s117, %s118
    %p129 = scmp.eq.s32.totalorder %s15, 0
    %p130 = por %p128, %p129
    %p131 = scmp.ne.s32.totalorder %s117, %s118
    %p132 = scmp.eq.s32.totalorder %s16, 1
    %p133 = por %p131, %p132
    %p135 = scmp.ne.s32.totalorder %s118, %s134
    %p136 = scmp.eq.s32.totalorder %s16, 0
    %p137 = por %p135, %p136
    %p138 = scmp.le.s32.totalorder 1, %s10
    %p139 = scmp.lt.s32.totalorder %s10, 3
    %p140 = pnand %p138, %p139
    %p141 = pneg %p140
    // Predicated region
    $region9: #{vae_forward.1} parent=5 // pred_check
      _
    $region10: #{vae_forward.1} parent=5 // pred_check_branch
      %143 = sbr.rel (%p140) target = $region12
    $region11: #{vae_forward.1} parent=5 // pred_region
      %s144 = ssub.s32 %s10, 1
      // Predicated region
      $region13: #{vae_forward.1} parent=11 // pred_check
        %p145 = pneg %p83
      $region14: #{vae_forward.1} parent=11 // pred_check_branch
        %147 = sbr.rel (%p145) target = $region16
      $region15: #{vae_forward.1} parent=11 // pred_region
        _
      $region16: #{vae_forward.1} parent=11 // pred_fallthru
        _
      // Predicated region
      $region17: #{vae_forward.1} parent=11 // pred_check
        %p148 = pneg %p104
      $region18: #{vae_forward.1} parent=11 // pred_check_branch
        %150 = sbr.rel (%p148) target = $region20
      $region19: #{vae_forward.1} parent=11 // pred_region
        _
      $region20: #{vae_forward.1} parent=11 // pred_fallthru
        _
    $region12: #{vae_forward.1} parent=5 // pred_fallthru
      _
    %p151 = scmp.lt.s32.totalorder %s10, 2
    // Predicated region
    $region21: #{vae_forward.1} parent=5 // pred_check
      %p152 = pneg %p151
    $region22: #{vae_forward.1} parent=5 // pred_check_branch
      %154 = sbr.rel (%p152) target = $region24
    $region23: #{vae_forward.1} parent=5 // pred_region
      // Predicated region
      $region25: #{vae_forward.1} parent=23 // pred_check
        %p155 = pneg %p30
      $region26: #{vae_forward.1} parent=23 // pred_check_branch
        %157 = sbr.rel (%p155) target = $region28
      $region27: #{vae_forward.1} parent=23 // pred_region
        %s158 = smul.u32 16, %s10
        %p159 = scmp.lt.s32.totalorder %s158, 31
        %s160 = scalar_select %p159, %s158, 31
        %s161 = smul.addr %s160, 8
        %s162 = scalar_lea.vmem %s0, %s161
        %s163 = smul.u32 16, %s10
      $region28: #{vae_forward.1} parent=23 // pred_fallthru
        _
      // Predicated region
      $region29: #{vae_forward.1} parent=23 // pred_check
        %p164 = pneg %p56
      $region30: #{vae_forward.1} parent=23 // pred_check_branch
        %166 = sbr.rel (%p164) target = $region32
      $region31: #{vae_forward.1} parent=23 // pred_region
        %s167 = smul.u32 16, %s10
        %p168 = scmp.lt.s32.totalorder %s167, 31
        %s169 = scalar_select %p168, %s167, 31
        %s170 = smul.addr %s169, 8
        %s171 = scalar_lea.vmem %s1, %s170
        %s172 = smul.u32 16, %s10
      $region32: #{vae_forward.1} parent=23 // pred_fallthru
        _
    $region24: #{vae_forward.1} parent=5 // pred_fallthru
      _
    %p173 = scmp.le.s32.totalorder 1, %s10
    %p174 = scmp.lt.s32.totalorder %s10, 3
    %p175 = pnand %p173, %p174
    %p176 = pneg %p175
    // Predicated region
    $region33: #{vae_forward.1} parent=5 // pred_check
      _
    $region34: #{vae_forward.1} parent=5 // pred_check_branch
      %178 = sbr.rel (%p175) target = $region36
    $region35: #{vae_forward.1} parent=5 // pred_region
      %s179 = ssub.s32 %s10, 1
      %s180 = smul.u32 16, %s15
      %p181 = scmp.lt.s32.totalorder %s180, 31
      %s182 = scalar_select %p181, %s180, 31
      %s183 = smul.addr %s182, 8
      %s184 = scalar_lea.vmem %s0, %s183
      %p185 = pneg %p36
      %p186 = pneg %p33
      %s187 = smul.u32 16, %s15
      %p188 = scmp.lt.s32.totalorder %s187, 31
      %s189 = scalar_select %p188, %s187, 31
      %s190 = smul.addr %s189, 8
      %s191 = scalar_lea.vmem %s1, %s190
      %p192 = pneg %p62
      %p193 = pneg %p59
      %p194 = pneg %p83
      %p195 = pneg %p80
      %p196 = pneg %p104
      %p197 = pneg %p101
      %p198 = pneg %p130
      %p199 = pneg %p127
      %s200 = smul.u32 16, %s15
      %p201 = scmp.lt.s32.totalorder %s200, 31
      %s202 = scalar_select %p201, %s200, 31
      %s203 = smul.addr %s202, 8
      %s204 = scalar_lea.vmem %s4, %s203
      %s205 = smul.u32 16, %s15
      %p206 = scmp.lt.s32.totalorder %s205, 31
      %s207 = scalar_select %p206, %s205, 31
      %s208 = smul.addr %s207, 8
      %s209 = scalar_lea.vmem %s0, %s208
      %s210 = smul.u32 16, %s15
      %s211 = smul.u32 16, %s15
      %p212 = scmp.lt.s32.totalorder %s211, 31
      %s213 = scalar_select %p212, %s211, 31
      %s214 = smul.addr %s213, 8
      %s215 = scalar_lea.vmem %s1, %s214
      %s216 = smul.u32 16, %s15
      %s217 = smul.u32 16, %s15
      %p218 = scmp.lt.s32.totalorder %s217, 31
      %s219 = scalar_select %p218, %s217, 31
      %s220 = smul.addr %s219, 8
      %s221 = scalar_lea.vmem %s4, %s220
      %s222 = smul.u32 16, %s15
      %v223 = vld [vmem:[%s209] sm:$0xff]
      %v224 = vld [vmem:[%s209 + $0x8] sm:$0xff]
      %v225 = vld [vmem:[%s209 + $0x10] sm:$0xff]
      %v226 = vld [vmem:[%s209 + $0x18] sm:$0xff]
      %v227 = vld [vmem:[%s209 + $0x20] sm:$0xff]
      %v228 = vld [vmem:[%s209 + $0x28] sm:$0xff]
      %v229 = vld [vmem:[%s209 + $0x30] sm:$0xff]
      %v230 = vld [vmem:[%s209 + $0x38] sm:$0xff]
      %v231 = vld [vmem:[%s209 + $0x40] sm:$0xff]
      %v232 = vld [vmem:[%s209 + $0x48] sm:$0xff]
      %v233 = vld [vmem:[%s209 + $0x50] sm:$0xff]
      %v234 = vld [vmem:[%s209 + $0x58] sm:$0xff]
      %v235 = vld [vmem:[%s209 + $0x60] sm:$0xff]
      %v236 = vld [vmem:[%s209 + $0x68] sm:$0xff]
      %v237 = vld [vmem:[%s209 + $0x70] sm:$0xff]
      %v238 = vld [vmem:[%s209 + $0x78] sm:$0xff]
      %v239 = vld [vmem:[%s2] sm:$0xff]
      %v240 = vld [vmem:[%s2 + $0x8] sm:$0xff]
      %v241 = vld [vmem:[%s2 + $0x10] sm:$0xff]
      %v242 = vld [vmem:[%s2 + $0x18] sm:$0xff]
      %v243 = vld [vmem:[%s3] sm:$0x1]
      %v244 = vlaneseq
      %v245 = vshrl.u32 %v244, 7
      %v246 = vsub.s32 0, %v245
      %v247 = vrot.slane %v243, %v246
      %vm248 = vcmask 261120
      %v250 = vsel %vm248, %v223, 0
      %v253 = vsel %vm248, %v224, 0
      %v256 = vsel %vm248, %v225, 0
      %v259 = vsel %vm248, %v226, 0
      %v262 = vsel %vm248, %v227, 0
      %v265 = vsel %vm248, %v228, 0
      %v268 = vsel %vm248, %v229, 0
      %v271 = vsel %vm248, %v230, 0
      %v274 = vsel %vm248, %v231, 0
      %v277 = vsel %vm248, %v232, 0
      %v280 = vsel %vm248, %v233, 0
      %v283 = vsel %vm248, %v234, 0
      %v286 = vsel %vm248, %v235, 0
      %v289 = vsel %vm248, %v236, 0
      %v292 = vsel %vm248, %v237, 0
      %v295 = vsel %vm248, %v238, 0
      %297 = vmatprep.subr.mxu0 0.0
      %298 = vmatpush1.msra.mxu0 0.0
      %299 = vmatprep.subr.mxu0 0.0
      %300 = vmatpush1.msra.mxu0 0.0
      %301 = vmatprep.subr.mxu0 0.0
      %302 = vmatpush1.msra.mxu0 0.0
      %303 = vmatprep.subr.mxu0 0.0
      %304 = vmatpush1.msra.mxu0 0.0
      %305 = vmatprep.subr.mxu0 0.0
      %306 = vmatpush1.msra.mxu0 0.0
      %307 = vmatprep.subr.mxu0 0.0
      %308 = vmatpush1.msra.mxu0 0.0
      %309 = vmatprep.subr.mxu0 0.0
      %310 = vmatpush1.msra.mxu0 0.0
      %311 = vmatprep.subr.mxu0 0.0
      %312 = vmatpush1.msra.mxu0 0.0
      %313 = vmatprep.subr.mxu0 0.0
      %314 = vmatpush1.msra.mxu0 0.0
      %315 = vmatprep.subr.mxu0 0.0
      %316 = vmatpush1.msra.mxu0 0.0
      %317 = vmatprep.subr.mxu0 0.0
      %318 = vmatpush1.msra.mxu0 0.0
      %319 = vmatprep.subr.mxu0 0.0
      %320 = vmatpush1.msra.mxu0 0.0
      %321 = vmatprep.subr.mxu0 0.0
      %322 = vmatpush1.msra.mxu0 %v242
      %323 = vmatprep.subr.mxu0 0.0
      %324 = vmatpush1.msra.mxu0 %v241
      %325 = vmatprep.subr.mxu0 0.0
      %326 = vmatpush1.msra.mxu0 %v240
      %327 = vmatprep.subr.mxu0 0.0
      %328 = vmatpush1.msra.mxu0 %v239
      %329 = vmatprep.subr.mxu0 0.0
      %330 = vmatpush2.msra.mxu0 0.0
      %331 = vmatprep.subr.mxu0 0.0
      %332 = vmatpush2.msra.mxu0 0.0
      %333 = vmatprep.subr.mxu0 0.0
      %334 = vmatpush2.msra.mxu0 0.0
      %335 = vmatprep.subr.mxu0 0.0
      %336 = vmatpush2.msra.mxu0 0.0
      %337 = vmatprep.subr.mxu0 0.0
      %338 = vmatpush2.msra.mxu0 0.0
      %339 = vmatprep.subr.mxu0 0.0
      %340 = vmatpush2.msra.mxu0 0.0
      %341 = vmatprep.subr.mxu0 0.0
      %342 = vmatpush2.msra.mxu0 0.0
      %343 = vmatprep.subr.mxu0 0.0
      %344 = vmatpush2.msra.mxu0 0.0
      %345 = vmatprep.subr.mxu0 0.0
      %346 = vmatpush2.msra.mxu0 0.0
      %347 = vmatprep.subr.mxu0 0.0
      %348 = vmatpush2.msra.mxu0 0.0
      %349 = vmatprep.subr.mxu0 0.0
      %350 = vmatpush2.msra.mxu0 0.0
      %351 = vmatprep.subr.mxu0 0.0
      %352 = vmatpush2.msra.mxu0 0.0
      %353 = vmatprep.subr.mxu0 0.0
      %354 = vmatpush2.msra.mxu0 0.0
      %355 = vmatprep.subr.mxu0 0.0
      %356 = vmatpush2.msra.mxu0 0.0
      %357 = vmatprep.subr.mxu0 0.0
      %358 = vmatpush2.msra.mxu0 0.0
      %359 = vmatprep.subr.mxu0 0.0
      %360 = vmatpush2.msra.mxu0 0.0
      %361 = vmatprep.mubr.f32.mxu0 0.0
      %362 = vmatmul.mubr.f32.gmra.mxu0 %v250
      %v363 = vpop.f32.mrf.mxu0
      %v364 = vadd.f32 %v247, %v363
      %v365 = vpop.f32.mrf.mxu0
      %366 = vmatprep.mubr.f32.mxu0 0.0
      %367 = vmatmul.mubr.f32.gmra.mxu0 %v253
      %v368 = vpop.f32.mrf.mxu0
      %v369 = vadd.f32 %v247, %v368
      %v370 = vpop.f32.mrf.mxu0
      %371 = vmatprep.mubr.f32.mxu0 0.0
      %372 = vmatmul.mubr.f32.gmra.mxu0 %v256
      %v373 = vpop.f32.mrf.mxu0
      %v374 = vadd.f32 %v247, %v373
      %v375 = vpop.f32.mrf.mxu0
      %376 = vmatprep.mubr.f32.mxu0 0.0
      %377 = vmatmul.mubr.f32.gmra.mxu0 %v259
      %v378 = vpop.f32.mrf.mxu0
      %v379 = vadd.f32 %v247, %v378
      %v380 = vpop.f32.mrf.mxu0
      %381 = vmatprep.mubr.f32.mxu0 0.0
      %382 = vmatmul.mubr.f32.gmra.mxu0 %v262
      %v383 = vpop.f32.mrf.mxu0
      %v384 = vadd.f32 %v247, %v383
      %v385 = vpop.f32.mrf.mxu0
      %386 = vmatprep.mubr.f32.mxu0 0.0
      %387 = vmatmul.mubr.f32.gmra.mxu0 %v265
      %v388 = vpop.f32.mrf.mxu0
      %v389 = vadd.f32 %v247, %v388
      %v390 = vpop.f32.mrf.mxu0
      %391 = vmatprep.mubr.f32.mxu0 0.0
      %392 = vmatmul.mubr.f32.gmra.mxu0 %v268
      %v393 = vpop.f32.mrf.mxu0
      %v394 = vadd.f32 %v247, %v393
      %v395 = vpop.f32.mrf.mxu0
      %396 = vmatprep.mubr.f32.mxu0 0.0
      %397 = vmatmul.mubr.f32.gmra.mxu0 %v271
      %v398 = vpop.f32.mrf.mxu0
      %v399 = vadd.f32 %v247, %v398
      %v400 = vpop.f32.mrf.mxu0
      %401 = vmatprep.mubr.f32.mxu0 0.0
      %402 = vmatmul.mubr.f32.gmra.mxu0 %v274
      %v403 = vpop.f32.mrf.mxu0
      %v404 = vadd.f32 %v247, %v403
      %v405 = vpop.f32.mrf.mxu0
      %406 = vmatprep.mubr.f32.mxu0 0.0
      %407 = vmatmul.mubr.f32.gmra.mxu0 %v277
      %v408 = vpop.f32.mrf.mxu0
      %v409 = vadd.f32 %v247, %v408
      %v410 = vpop.f32.mrf.mxu0
      %411 = vmatprep.mubr.f32.mxu0 0.0
      %412 = vmatmul.mubr.f32.gmra.mxu0 %v280
      %v413 = vpop.f32.mrf.mxu0
      %v414 = vadd.f32 %v247, %v413
      %v415 = vpop.f32.mrf.mxu0
      %416 = vmatprep.mubr.f32.mxu0 0.0
      %417 = vmatmul.mubr.f32.gmra.mxu0 %v283
      %v418 = vpop.f32.mrf.mxu0
      %v419 = vadd.f32 %v247, %v418
      %v420 = vpop.f32.mrf.mxu0
      %421 = vmatprep.mubr.f32.mxu0 0.0
      %422 = vmatmul.mubr.f32.gmra.mxu0 %v286
      %v423 = vpop.f32.mrf.mxu0
      %v424 = vadd.f32 %v247, %v423
      %v425 = vpop.f32.mrf.mxu0
      %426 = vmatprep.mubr.f32.mxu0 0.0
      %427 = vmatmul.mubr.f32.gmra.mxu0 %v289
      %v428 = vpop.f32.mrf.mxu0
      %v429 = vadd.f32 %v247, %v428
      %v430 = vpop.f32.mrf.mxu0
      %431 = vmatprep.mubr.f32.mxu0 0.0
      %432 = vmatmul.mubr.f32.gmra.mxu0 %v292
      %v433 = vpop.f32.mrf.mxu0
      %v434 = vadd.f32 %v247, %v433
      %v435 = vpop.f32.mrf.mxu0
      %436 = vmatprep.mubr.f32.mxu0 0.0
      %437 = vmatmul.mubr.f32.gmra.mxu0 %v295
      %v438 = vpop.f32.mrf.mxu0
      %v439 = vadd.f32 %v247, %v438
      %v440 = vpop.f32.mrf.mxu0
      %441 = vdwg.mxu0
      %v442 = vmax.f32 %v364, 0.0
      %v443 = vmax.f32 %v369, 0.0
      %v444 = vmax.f32 %v374, 0.0
      %v445 = vmax.f32 %v379, 0.0
      %v446 = vmax.f32 %v384, 0.0
      %v447 = vmax.f32 %v389, 0.0
      %v448 = vmax.f32 %v394, 0.0
      %v449 = vmax.f32 %v399, 0.0
      %v450 = vmax.f32 %v404, 0.0
      %v451 = vmax.f32 %v409, 0.0
      %v452 = vmax.f32 %v414, 0.0
      %v453 = vmax.f32 %v419, 0.0
      %v454 = vmax.f32 %v424, 0.0
      %v455 = vmax.f32 %v429, 0.0
      %v456 = vmax.f32 %v434, 0.0
      %v457 = vmax.f32 %v439, 0.0
      %v458 = vld [vmem:[%s2 + $0x40] sm:$0xff]
      %v459 = vld [vmem:[%s2 + $0x48] sm:$0xff]
      %v460 = vld [vmem:[%s2 + $0x50] sm:$0xff]
      %v461 = vld [vmem:[%s2 + $0x58] sm:$0xff]
      %v462 = vld [vmem:[%s2 + $0x60] sm:$0xff]
      %v463 = vld [vmem:[%s2 + $0x68] sm:$0xff]
      %v464 = vld [vmem:[%s2 + $0x70] sm:$0xff]
      %v465 = vld [vmem:[%s2 + $0x78] sm:$0xff]
      %v466 = vld [vmem:[%s3 + $0x1] sm:$0x1]
      %v467 = vlaneseq
      %v468 = vshrl.u32 %v467, 7
      %v469 = vsub.s32 0, %v468
      %v470 = vrot.slane %v466, %v469
      %vm471 = vcmask 523264
      %v473 = vsel %vm471, %v442, 0
      %v476 = vsel %vm471, %v443, 0
      %v479 = vsel %vm471, %v444, 0
      %v482 = vsel %vm471, %v445, 0
      %v485 = vsel %vm471, %v446, 0
      %v488 = vsel %vm471, %v447, 0
      %v491 = vsel %vm471, %v448, 0
      %v494 = vsel %vm471, %v449, 0
      %v497 = vsel %vm471, %v450, 0
      %v500 = vsel %vm471, %v451, 0
      %v503 = vsel %vm471, %v452, 0
      %v506 = vsel %vm471, %v453, 0
      %v509 = vsel %vm471, %v454, 0
      %v512 = vsel %vm471, %v455, 0
      %v515 = vsel %vm471, %v456, 0
      %v518 = vsel %vm471, %v457, 0
      %520 = vmatprep.subr.mxu0 0.0
      %521 = vmatpush1.msra.mxu0 0.0
      %522 = vmatprep.subr.mxu0 0.0
      %523 = vmatpush1.msra.mxu0 0.0
      %524 = vmatprep.subr.mxu0 0.0
      %525 = vmatpush1.msra.mxu0 0.0
      %526 = vmatprep.subr.mxu0 0.0
      %527 = vmatpush1.msra.mxu0 0.0
      %528 = vmatprep.subr.mxu0 0.0
      %529 = vmatpush1.msra.mxu0 0.0
      %530 = vmatprep.subr.mxu0 0.0
      %531 = vmatpush1.msra.mxu0 0.0
      %532 = vmatprep.subr.mxu0 0.0
      %533 = vmatpush1.msra.mxu0 0.0
      %534 = vmatprep.subr.mxu0 0.0
      %535 = vmatpush1.msra.mxu0 0.0
      %536 = vmatprep.subr.mxu0 0.0
      %537 = vmatpush1.msra.mxu0 %v465
      %538 = vmatprep.subr.mxu0 0.0
      %539 = vmatpush1.msra.mxu0 %v464
      %540 = vmatprep.subr.mxu0 0.0
      %541 = vmatpush1.msra.mxu0 %v463
      %542 = vmatprep.subr.mxu0 0.0
      %543 = vmatpush1.msra.mxu0 %v462
      %544 = vmatprep.subr.mxu0 0.0
      %545 = vmatpush1.msra.mxu0 %v461
      %546 = vmatprep.subr.mxu0 0.0
      %547 = vmatpush1.msra.mxu0 %v460
      %548 = vmatprep.subr.mxu0 0.0
      %549 = vmatpush1.msra.mxu0 %v459
      %550 = vmatprep.subr.mxu0 0.0
      %551 = vmatpush1.msra.mxu0 %v458
      %552 = vmatprep.subr.mxu0 0.0
      %553 = vmatpush2.msra.mxu0 0.0
      %554 = vmatprep.subr.mxu0 0.0
      %555 = vmatpush2.msra.mxu0 0.0
      %556 = vmatprep.subr.mxu0 0.0
      %557 = vmatpush2.msra.mxu0 0.0
      %558 = vmatprep.subr.mxu0 0.0
      %559 = vmatpush2.msra.mxu0 0.0
      %560 = vmatprep.subr.mxu0 0.0
      %561 = vmatpush2.msra.mxu0 0.0
      %562 = vmatprep.subr.mxu0 0.0
      %563 = vmatpush2.msra.mxu0 0.0
      %564 = vmatprep.subr.mxu0 0.0
      %565 = vmatpush2.msra.mxu0 0.0
      %566 = vmatprep.subr.mxu0 0.0
      %567 = vmatpush2.msra.mxu0 0.0
      %568 = vmatprep.subr.mxu0 0.0
      %569 = vmatpush2.msra.mxu0 0.0
      %570 = vmatprep.subr.mxu0 0.0
      %571 = vmatpush2.msra.mxu0 0.0
      %572 = vmatprep.subr.mxu0 0.0
      %573 = vmatpush2.msra.mxu0 0.0
      %574 = vmatprep.subr.mxu0 0.0
      %575 = vmatpush2.msra.mxu0 0.0
      %576 = vmatprep.subr.mxu0 0.0
      %577 = vmatpush2.msra.mxu0 0.0
      %578 = vmatprep.subr.mxu0 0.0
      %579 = vmatpush2.msra.mxu0 0.0
      %580 = vmatprep.subr.mxu0 0.0
      %581 = vmatpush2.msra.mxu0 0.0
      %582 = vmatprep.subr.mxu0 0.0
      %583 = vmatpush2.msra.mxu0 0.0
      %584 = vmatprep.mubr.f32.mxu0 0.0
      %585 = vmatmul.mubr.f32.gmra.mxu0 %v473
      %v586 = vpop.f32.mrf.mxu0
      %v587 = vadd.f32 %v470, %v586
      %v588 = vpop.f32.mrf.mxu0
      %589 = vmatprep.mubr.f32.mxu0 0.0
      %590 = vmatmul.mubr.f32.gmra.mxu0 %v476
      %v591 = vpop.f32.mrf.mxu0
      %v592 = vadd.f32 %v470, %v591
      %v593 = vpop.f32.mrf.mxu0
      %594 = vmatprep.mubr.f32.mxu0 0.0
      %595 = vmatmul.mubr.f32.gmra.mxu0 %v479
      %v596 = vpop.f32.mrf.mxu0
      %v597 = vadd.f32 %v470, %v596
      %v598 = vpop.f32.mrf.mxu0
      %599 = vmatprep.mubr.f32.mxu0 0.0
      %600 = vmatmul.mubr.f32.gmra.mxu0 %v482
      %v601 = vpop.f32.mrf.mxu0
      %v602 = vadd.f32 %v470, %v601
      %v603 = vpop.f32.mrf.mxu0
      %604 = vmatprep.mubr.f32.mxu0 0.0
      %605 = vmatmul.mubr.f32.gmra.mxu0 %v485
      %v606 = vpop.f32.mrf.mxu0
      %v607 = vadd.f32 %v470, %v606
      %v608 = vpop.f32.mrf.mxu0
      %609 = vmatprep.mubr.f32.mxu0 0.0
      %610 = vmatmul.mubr.f32.gmra.mxu0 %v488
      %v611 = vpop.f32.mrf.mxu0
      %v612 = vadd.f32 %v470, %v611
      %v613 = vpop.f32.mrf.mxu0
      %614 = vmatprep.mubr.f32.mxu0 0.0
      %615 = vmatmul.mubr.f32.gmra.mxu0 %v491
      %v616 = vpop.f32.mrf.mxu0
      %v617 = vadd.f32 %v470, %v616
      %v618 = vpop.f32.mrf.mxu0
      %619 = vmatprep.mubr.f32.mxu0 0.0
      %620 = vmatmul.mubr.f32.gmra.mxu0 %v494
      %v621 = vpop.f32.mrf.mxu0
      %v622 = vadd.f32 %v470, %v621
      %v623 = vpop.f32.mrf.mxu0
      %624 = vmatprep.mubr.f32.mxu0 0.0
      %625 = vmatmul.mubr.f32.gmra.mxu0 %v497
      %v626 = vpop.f32.mrf.mxu0
      %v627 = vadd.f32 %v470, %v626
      %v628 = vpop.f32.mrf.mxu0
      %629 = vmatprep.mubr.f32.mxu0 0.0
      %630 = vmatmul.mubr.f32.gmra.mxu0 %v500
      %v631 = vpop.f32.mrf.mxu0
      %v632 = vadd.f32 %v470, %v631
      %v633 = vpop.f32.mrf.mxu0
      %634 = vmatprep.mubr.f32.mxu0 0.0
      %635 = vmatmul.mubr.f32.gmra.mxu0 %v503
      %v636 = vpop.f32.mrf.mxu0
      %v637 = vadd.f32 %v470, %v636
      %v638 = vpop.f32.mrf.mxu0
      %639 = vmatprep.mubr.f32.mxu0 0.0
      %640 = vmatmul.mubr.f32.gmra.mxu0 %v506
      %v641 = vpop.f32.mrf.mxu0
      %v642 = vadd.f32 %v470, %v641
      %v643 = vpop.f32.mrf.mxu0
      %644 = vmatprep.mubr.f32.mxu0 0.0
      %645 = vmatmul.mubr.f32.gmra.mxu0 %v509
      %v646 = vpop.f32.mrf.mxu0
      %v647 = vadd.f32 %v470, %v646
      %v648 = vpop.f32.mrf.mxu0
      %649 = vmatprep.mubr.f32.mxu0 0.0
      %650 = vmatmul.mubr.f32.gmra.mxu0 %v512
      %v651 = vpop.f32.mrf.mxu0
      %v652 = vadd.f32 %v470, %v651
      %v653 = vpop.f32.mrf.mxu0
      %654 = vmatprep.mubr.f32.mxu0 0.0
      %655 = vmatmul.mubr.f32.gmra.mxu0 %v515
      %v656 = vpop.f32.mrf.mxu0
      %v657 = vadd.f32 %v470, %v656
      %v658 = vpop.f32.mrf.mxu0
      %659 = vmatprep.mubr.f32.mxu0 0.0
      %660 = vmatmul.mubr.f32.gmra.mxu0 %v518
      %v661 = vpop.f32.mrf.mxu0
      %v662 = vadd.f32 %v470, %v661
      %v663 = vpop.f32.mrf.mxu0
      %664 = vdwg.mxu0
      %v665 = vmax.f32 %v587, 0.0
      %v666 = vmax.f32 %v592, 0.0
      %v667 = vmax.f32 %v597, 0.0
      %v668 = vmax.f32 %v602, 0.0
      %v669 = vmax.f32 %v607, 0.0
      %v670 = vmax.f32 %v612, 0.0
      %v671 = vmax.f32 %v617, 0.0
      %v672 = vmax.f32 %v622, 0.0
      %v673 = vmax.f32 %v627, 0.0
      %v674 = vmax.f32 %v632, 0.0
      %v675 = vmax.f32 %v637, 0.0
      %v676 = vmax.f32 %v642, 0.0
      %v677 = vmax.f32 %v647, 0.0
      %v678 = vmax.f32 %v652, 0.0
      %v679 = vmax.f32 %v657, 0.0
      %v680 = vmax.f32 %v662, 0.0
      %v681 = vld [vmem:[%s2 + $0x80] sm:$0xff]
      %v682 = vld [vmem:[%s2 + $0x88] sm:$0xff]
      %v683 = vld [vmem:[%s2 + $0x90] sm:$0xff]
      %v684 = vld [vmem:[%s2 + $0x98] sm:$0xff]
      %v685 = vld [vmem:[%s3 + $0x2] sm:$0x1]
      %v686 = vlaneseq
      %v687 = vshrl.u32 %v686, 7
      %v688 = vsub.s32 0, %v687
      %v689 = vrot.slane %v685, %v688
      %v691 = vsel %vm248, %v665, 0
      %v694 = vsel %vm248, %v666, 0
      %v697 = vsel %vm248, %v667, 0
      %v700 = vsel %vm248, %v668, 0
      %v703 = vsel %vm248, %v669, 0
      %v706 = vsel %vm248, %v670, 0
      %v709 = vsel %vm248, %v671, 0
      %v712 = vsel %vm248, %v672, 0
      %v715 = vsel %vm248, %v673, 0
      %v718 = vsel %vm248, %v674, 0
      %v721 = vsel %vm248, %v675, 0
      %v724 = vsel %vm248, %v676, 0
      %v727 = vsel %vm248, %v677, 0
      %v730 = vsel %vm248, %v678, 0
      %v733 = vsel %vm248, %v679, 0
      %v736 = vsel %vm248, %v680, 0
      %738 = vmatprep.subr.mxu0 0.0
      %739 = vmatpush1.msra.mxu0 0.0
      %740 = vmatprep.subr.mxu0 0.0
      %741 = vmatpush1.msra.mxu0 0.0
      %742 = vmatprep.subr.mxu0 0.0
      %743 = vmatpush1.msra.mxu0 0.0
      %744 = vmatprep.subr.mxu0 0.0
      %745 = vmatpush1.msra.mxu0 0.0
      %746 = vmatprep.subr.mxu0 0.0
      %747 = vmatpush1.msra.mxu0 0.0
      %748 = vmatprep.subr.mxu0 0.0
      %749 = vmatpush1.msra.mxu0 0.0
      %750 = vmatprep.subr.mxu0 0.0
      %751 = vmatpush1.msra.mxu0 0.0
      %752 = vmatprep.subr.mxu0 0.0
      %753 = vmatpush1.msra.mxu0 0.0
      %754 = vmatprep.subr.mxu0 0.0
      %755 = vmatpush1.msra.mxu0 0.0
      %756 = vmatprep.subr.mxu0 0.0
      %757 = vmatpush1.msra.mxu0 0.0
      %758 = vmatprep.subr.mxu0 0.0
      %759 = vmatpush1.msra.mxu0 0.0
      %760 = vmatprep.subr.mxu0 0.0
      %761 = vmatpush1.msra.mxu0 0.0
      %762 = vmatprep.subr.mxu0 0.0
      %763 = vmatpush1.msra.mxu0 %v684
      %764 = vmatprep.subr.mxu0 0.0
      %765 = vmatpush1.msra.mxu0 %v683
      %766 = vmatprep.subr.mxu0 0.0
      %767 = vmatpush1.msra.mxu0 %v682
      %768 = vmatprep.subr.mxu0 0.0
      %769 = vmatpush1.msra.mxu0 %v681
      %770 = vmatprep.subr.mxu0 0.0
      %771 = vmatpush2.msra.mxu0 0.0
      %772 = vmatprep.subr.mxu0 0.0
      %773 = vmatpush2.msra.mxu0 0.0
      %774 = vmatprep.subr.mxu0 0.0
      %775 = vmatpush2.msra.mxu0 0.0
      %776 = vmatprep.subr.mxu0 0.0
      %777 = vmatpush2.msra.mxu0 0.0
      %778 = vmatprep.subr.mxu0 0.0
      %779 = vmatpush2.msra.mxu0 0.0
      %780 = vmatprep.subr.mxu0 0.0
      %781 = vmatpush2.msra.mxu0 0.0
      %782 = vmatprep.subr.mxu0 0.0
      %783 = vmatpush2.msra.mxu0 0.0
      %784 = vmatprep.subr.mxu0 0.0
      %785 = vmatpush2.msra.mxu0 0.0
      %786 = vmatprep.subr.mxu0 0.0
      %787 = vmatpush2.msra.mxu0 0.0
      %788 = vmatprep.subr.mxu0 0.0
      %789 = vmatpush2.msra.mxu0 0.0
      %790 = vmatprep.subr.mxu0 0.0
      %791 = vmatpush2.msra.mxu0 0.0
      %792 = vmatprep.subr.mxu0 0.0
      %793 = vmatpush2.msra.mxu0 0.0
      %794 = vmatprep.subr.mxu0 0.0
      %795 = vmatpush2.msra.mxu0 0.0
      %796 = vmatprep.subr.mxu0 0.0
      %797 = vmatpush2.msra.mxu0 0.0
      %798 = vmatprep.subr.mxu0 0.0
      %799 = vmatpush2.msra.mxu0 0.0
      %800 = vmatprep.subr.mxu0 0.0
      %801 = vmatpush2.msra.mxu0 0.0
      %802 = vmatprep.mubr.f32.mxu0 0.0
      %803 = vmatmul.mubr.f32.gmra.mxu0 %v691
      %v804 = vpop.f32.mrf.mxu0
      %v805 = vadd.f32 %v689, %v804
      %v806 = vpop.f32.mrf.mxu0
      %807 = vmatprep.mubr.f32.mxu0 0.0
      %808 = vmatmul.mubr.f32.gmra.mxu0 %v694
      %v809 = vpop.f32.mrf.mxu0
      %v810 = vadd.f32 %v689, %v809
      %v811 = vpop.f32.mrf.mxu0
      %812 = vmatprep.mubr.f32.mxu0 0.0
      %813 = vmatmul.mubr.f32.gmra.mxu0 %v697
      %v814 = vpop.f32.mrf.mxu0
      %v815 = vadd.f32 %v689, %v814
      %v816 = vpop.f32.mrf.mxu0
      %817 = vmatprep.mubr.f32.mxu0 0.0
      %818 = vmatmul.mubr.f32.gmra.mxu0 %v700
      %v819 = vpop.f32.mrf.mxu0
      %v820 = vadd.f32 %v689, %v819
      %v821 = vpop.f32.mrf.mxu0
      %822 = vmatprep.mubr.f32.mxu0 0.0
      %823 = vmatmul.mubr.f32.gmra.mxu0 %v703
      %v824 = vpop.f32.mrf.mxu0
      %v825 = vadd.f32 %v689, %v824
      %v826 = vpop.f32.mrf.mxu0
      %827 = vmatprep.mubr.f32.mxu0 0.0
      %828 = vmatmul.mubr.f32.gmra.mxu0 %v706
      %v829 = vpop.f32.mrf.mxu0
      %v830 = vadd.f32 %v689, %v829
      %v831 = vpop.f32.mrf.mxu0
      %832 = vmatprep.mubr.f32.mxu0 0.0
      %833 = vmatmul.mubr.f32.gmra.mxu0 %v709
      %v834 = vpop.f32.mrf.mxu0
      %v835 = vadd.f32 %v689, %v834
      %v836 = vpop.f32.mrf.mxu0
      %837 = vmatprep.mubr.f32.mxu0 0.0
      %838 = vmatmul.mubr.f32.gmra.mxu0 %v712
      %v839 = vpop.f32.mrf.mxu0
      %v840 = vadd.f32 %v689, %v839
      %v841 = vpop.f32.mrf.mxu0
      %842 = vmatprep.mubr.f32.mxu0 0.0
      %843 = vmatmul.mubr.f32.gmra.mxu0 %v715
      %v844 = vpop.f32.mrf.mxu0
      %v845 = vadd.f32 %v689, %v844
      %v846 = vpop.f32.mrf.mxu0
      %847 = vmatprep.mubr.f32.mxu0 0.0
      %848 = vmatmul.mubr.f32.gmra.mxu0 %v718
      %v849 = vpop.f32.mrf.mxu0
      %v850 = vadd.f32 %v689, %v849
      %v851 = vpop.f32.mrf.mxu0
      %852 = vmatprep.mubr.f32.mxu0 0.0
      %853 = vmatmul.mubr.f32.gmra.mxu0 %v721
      %v854 = vpop.f32.mrf.mxu0
      %v855 = vadd.f32 %v689, %v854
      %v856 = vpop.f32.mrf.mxu0
      %857 = vmatprep.mubr.f32.mxu0 0.0
      %858 = vmatmul.mubr.f32.gmra.mxu0 %v724
      %v859 = vpop.f32.mrf.mxu0
      %v860 = vadd.f32 %v689, %v859
      %v861 = vpop.f32.mrf.mxu0
      %862 = vmatprep.mubr.f32.mxu0 0.0
      %863 = vmatmul.mubr.f32.gmra.mxu0 %v727
      %v864 = vpop.f32.mrf.mxu0
      %v865 = vadd.f32 %v689, %v864
      %v866 = vpop.f32.mrf.mxu0
      %867 = vmatprep.mubr.f32.mxu0 0.0
      %868 = vmatmul.mubr.f32.gmra.mxu0 %v730
      %v869 = vpop.f32.mrf.mxu0
      %v870 = vadd.f32 %v689, %v869
      %v871 = vpop.f32.mrf.mxu0
      %872 = vmatprep.mubr.f32.mxu0 0.0
      %873 = vmatmul.mubr.f32.gmra.mxu0 %v733
      %v874 = vpop.f32.mrf.mxu0
      %v875 = vadd.f32 %v689, %v874
      %v876 = vpop.f32.mrf.mxu0
      %877 = vmatprep.mubr.f32.mxu0 0.0
      %878 = vmatmul.mubr.f32.gmra.mxu0 %v736
      %v879 = vpop.f32.mrf.mxu0
      %v880 = vadd.f32 %v689, %v879
      %v881 = vpop.f32.mrf.mxu0
      %882 = vdwg.mxu0
      %v883 = vld [vmem:[%s215] sm:$0xff]
      %v884 = vld [vmem:[%s215 + $0x8] sm:$0xff]
      %v885 = vld [vmem:[%s215 + $0x10] sm:$0xff]
      %v886 = vld [vmem:[%s215 + $0x18] sm:$0xff]
      %v887 = vld [vmem:[%s215 + $0x20] sm:$0xff]
      %v888 = vld [vmem:[%s215 + $0x28] sm:$0xff]
      %v889 = vld [vmem:[%s215 + $0x30] sm:$0xff]
      %v890 = vld [vmem:[%s215 + $0x38] sm:$0xff]
      %v891 = vld [vmem:[%s215 + $0x40] sm:$0xff]
      %v892 = vld [vmem:[%s215 + $0x48] sm:$0xff]
      %v893 = vld [vmem:[%s215 + $0x50] sm:$0xff]
      %v894 = vld [vmem:[%s215 + $0x58] sm:$0xff]
      %v895 = vld [vmem:[%s215 + $0x60] sm:$0xff]
      %v896 = vld [vmem:[%s215 + $0x68] sm:$0xff]
      %v897 = vld [vmem:[%s215 + $0x70] sm:$0xff]
      %v898 = vld [vmem:[%s215 + $0x78] sm:$0xff]
      %v899 = vmul.f32 %v805, 0.5
      %v900 = vmul.f32 %v810, 0.5
      %v901 = vmul.f32 %v815, 0.5
      %v902 = vmul.f32 %v820, 0.5
      %v903 = vmul.f32 %v825, 0.5
      %v904 = vmul.f32 %v830, 0.5
      %v905 = vmul.f32 %v835, 0.5
      %v906 = vmul.f32 %v840, 0.5
      %v907 = vmul.f32 %v845, 0.5
      %v908 = vmul.f32 %v850, 0.5
      %v909 = vmul.f32 %v855, 0.5
      %v910 = vmul.f32 %v860, 0.5
      %v911 = vmul.f32 %v865, 0.5
      %v912 = vmul.f32 %v870, 0.5
      %v913 = vmul.f32 %v875, 0.5
      %v914 = vmul.f32 %v880, 0.5
      %v915 = vmul.f32 %v899, 1.442695
      %v916 = vpow.pop %v915
      %v917 = vmul.f32 %v900, 1.442695
      %v918 = vpow.pop %v917
      %v919 = vmul.f32 %v901, 1.442695
      %v920 = vpow.pop %v919
      %v921 = vmul.f32 %v902, 1.442695
      %v922 = vpow.pop %v921
      %v923 = vmul.f32 %v903, 1.442695
      %v924 = vpow.pop %v923
      %v925 = vmul.f32 %v904, 1.442695
      %v926 = vpow.pop %v925
      %v927 = vmul.f32 %v905, 1.442695
      %v928 = vpow.pop %v927
      %v929 = vmul.f32 %v906, 1.442695
      %v930 = vpow.pop %v929
      %v931 = vmul.f32 %v907, 1.442695
      %v932 = vpow.pop %v931
      %v933 = vmul.f32 %v908, 1.442695
      %v934 = vpow.pop %v933
      %v935 = vmul.f32 %v909, 1.442695
      %v936 = vpow.pop %v935
      %v937 = vmul.f32 %v910, 1.442695
      %v938 = vpow.pop %v937
      %v939 = vmul.f32 %v911, 1.442695
      %v940 = vpow.pop %v939
      %v941 = vmul.f32 %v912, 1.442695
      %v942 = vpow.pop %v941
      %v943 = vmul.f32 %v913, 1.442695
      %v944 = vpow.pop %v943
      %v945 = vmul.f32 %v914, 1.442695
      %v946 = vpow.pop %v945
      %963 = vrot.lane.b32.xlu0 %v916, 120
      %v964 = vpop.permute.xlu0 %963
      %965 = vrot.lane.b32.xlu0 %v918, 120
      %v966 = vpop.permute.xlu0 %965
      %967 = vrot.lane.b32.xlu0 %v920, 120
      %v968 = vpop.permute.xlu0 %967
      %969 = vrot.lane.b32.xlu0 %v922, 120
      %v970 = vpop.permute.xlu0 %969
      %971 = vrot.lane.b32.xlu0 %v924, 120
      %v972 = vpop.permute.xlu0 %971
      %973 = vrot.lane.b32.xlu0 %v926, 120
      %v974 = vpop.permute.xlu0 %973
      %975 = vrot.lane.b32.xlu0 %v928, 120
      %v976 = vpop.permute.xlu0 %975
      %977 = vrot.lane.b32.xlu0 %v930, 120
      %v978 = vpop.permute.xlu0 %977
      %979 = vrot.lane.b32.xlu0 %v932, 120
      %v980 = vpop.permute.xlu0 %979
      %981 = vrot.lane.b32.xlu0 %v934, 120
      %v982 = vpop.permute.xlu0 %981
      %983 = vrot.lane.b32.xlu0 %v936, 120
      %v984 = vpop.permute.xlu0 %983
      %985 = vrot.lane.b32.xlu0 %v938, 120
      %v986 = vpop.permute.xlu0 %985
      %987 = vrot.lane.b32.xlu0 %v940, 120
      %v988 = vpop.permute.xlu0 %987
      %989 = vrot.lane.b32.xlu0 %v942, 120
      %v990 = vpop.permute.xlu0 %989
      %991 = vrot.lane.b32.xlu0 %v944, 120
      %v992 = vpop.permute.xlu0 %991
      %993 = vrot.lane.b32.xlu0 %v946, 120
      %v994 = vpop.permute.xlu0 %993
      %v1011 = vmul.f32 %v883, %v964
      %v1012 = vmul.f32 %v884, %v966
      %v1013 = vmul.f32 %v885, %v968
      %v1014 = vmul.f32 %v886, %v970
      %v1015 = vmul.f32 %v887, %v972
      %v1016 = vmul.f32 %v888, %v974
      %v1017 = vmul.f32 %v889, %v976
      %v1018 = vmul.f32 %v890, %v978
      %v1019 = vmul.f32 %v891, %v980
      %v1020 = vmul.f32 %v892, %v982
      %v1021 = vmul.f32 %v893, %v984
      %v1022 = vmul.f32 %v894, %v986
      %v1023 = vmul.f32 %v895, %v988
      %v1024 = vmul.f32 %v896, %v990
      %v1025 = vmul.f32 %v897, %v992
      %v1026 = vmul.f32 %v898, %v994
      %v1027 = vadd.f32 %v805, %v1011
      %v1028 = vadd.f32 %v810, %v1012
      %v1029 = vadd.f32 %v815, %v1013
      %v1030 = vadd.f32 %v820, %v1014
      %v1031 = vadd.f32 %v825, %v1015
      %v1032 = vadd.f32 %v830, %v1016
      %v1033 = vadd.f32 %v835, %v1017
      %v1034 = vadd.f32 %v840, %v1018
      %v1035 = vadd.f32 %v845, %v1019
      %v1036 = vadd.f32 %v850, %v1020
      %v1037 = vadd.f32 %v855, %v1021
      %v1038 = vadd.f32 %v860, %v1022
      %v1039 = vadd.f32 %v865, %v1023
      %v1040 = vadd.f32 %v870, %v1024
      %v1041 = vadd.f32 %v875, %v1025
      %v1042 = vadd.f32 %v880, %v1026
      %v1043 = vld [vmem:[%s2 + $0xc0] sm:$0xff]
      %v1044 = vld [vmem:[%s3 + $0x3] sm:$0x1]
      %v1045 = vlaneseq
      %v1046 = vshrl.u32 %v1045, 7
      %v1047 = vsub.s32 0, %v1046
      %v1048 = vrot.slane %v1044, %v1047
      %vm1049 = vcmask 64512
      %v1051 = vsel %vm1049, %v1027, 0
      %v1054 = vsel %vm1049, %v1028, 0
      %v1057 = vsel %vm1049, %v1029, 0
      %v1060 = vsel %vm1049, %v1030, 0
      %v1063 = vsel %vm1049, %v1031, 0
      %v1066 = vsel %vm1049, %v1032, 0
      %v1069 = vsel %vm1049, %v1033, 0
      %v1072 = vsel %vm1049, %v1034, 0
      %v1075 = vsel %vm1049, %v1035, 0
      %v1078 = vsel %vm1049, %v1036, 0
      %v1081 = vsel %vm1049, %v1037, 0
      %v1084 = vsel %vm1049, %v1038, 0
      %v1087 = vsel %vm1049, %v1039, 0
      %v1090 = vsel %vm1049, %v1040, 0
      %v1093 = vsel %vm1049, %v1041, 0
      %v1096 = vsel %vm1049, %v1042, 0
      %1098 = vmatprep.subr.mxu0 0.0
      %1099 = vmatpush1.msra.mxu0 0.0
      %1100 = vmatprep.subr.mxu0 0.0
      %1101 = vmatpush1.msra.mxu0 0.0
      %1102 = vmatprep.subr.mxu0 0.0
      %1103 = vmatpush1.msra.mxu0 0.0
      %1104 = vmatprep.subr.mxu0 0.0
      %1105 = vmatpush1.msra.mxu0 0.0
      %1106 = vmatprep.subr.mxu0 0.0
      %1107 = vmatpush1.msra.mxu0 0.0
      %1108 = vmatprep.subr.mxu0 0.0
      %1109 = vmatpush1.msra.mxu0 0.0
      %1110 = vmatprep.subr.mxu0 0.0
      %1111 = vmatpush1.msra.mxu0 0.0
      %1112 = vmatprep.subr.mxu0 0.0
      %1113 = vmatpush1.msra.mxu0 0.0
      %1114 = vmatprep.subr.mxu0 0.0
      %1115 = vmatpush1.msra.mxu0 0.0
      %1116 = vmatprep.subr.mxu0 0.0
      %1117 = vmatpush1.msra.mxu0 0.0
      %1118 = vmatprep.subr.mxu0 0.0
      %1119 = vmatpush1.msra.mxu0 0.0
      %1120 = vmatprep.subr.mxu0 0.0
      %1121 = vmatpush1.msra.mxu0 0.0
      %1122 = vmatprep.subr.mxu0 0.0
      %1123 = vmatpush1.msra.mxu0 0.0
      %1124 = vmatprep.subr.mxu0 0.0
      %1125 = vmatpush1.msra.mxu0 0.0
      %1126 = vmatprep.subr.mxu0 0.0
      %1127 = vmatpush1.msra.mxu0 0.0
      %1128 = vmatprep.subr.mxu0 0.0
      %1129 = vmatpush1.msra.mxu0 %v1043
      %1130 = vmatprep.subr.mxu0 0.0
      %1131 = vmatpush2.msra.mxu0 0.0
      %1132 = vmatprep.subr.mxu0 0.0
      %1133 = vmatpush2.msra.mxu0 0.0
      %1134 = vmatprep.subr.mxu0 0.0
      %1135 = vmatpush2.msra.mxu0 0.0
      %1136 = vmatprep.subr.mxu0 0.0
      %1137 = vmatpush2.msra.mxu0 0.0
      %1138 = vmatprep.subr.mxu0 0.0
      %1139 = vmatpush2.msra.mxu0 0.0
      %1140 = vmatprep.subr.mxu0 0.0
      %1141 = vmatpush2.msra.mxu0 0.0
      %1142 = vmatprep.subr.mxu0 0.0
      %1143 = vmatpush2.msra.mxu0 0.0
      %1144 = vmatprep.subr.mxu0 0.0
      %1145 = vmatpush2.msra.mxu0 0.0
      %1146 = vmatprep.subr.mxu0 0.0
      %1147 = vmatpush2.msra.mxu0 0.0
      %1148 = vmatprep.subr.mxu0 0.0
      %1149 = vmatpush2.msra.mxu0 0.0
      %1150 = vmatprep.subr.mxu0 0.0
      %1151 = vmatpush2.msra.mxu0 0.0
      %1152 = vmatprep.subr.mxu0 0.0
      %1153 = vmatpush2.msra.mxu0 0.0
      %1154 = vmatprep.subr.mxu0 0.0
      %1155 = vmatpush2.msra.mxu0 0.0
      %1156 = vmatprep.subr.mxu0 0.0
      %1157 = vmatpush2.msra.mxu0 0.0
      %1158 = vmatprep.subr.mxu0 0.0
      %1159 = vmatpush2.msra.mxu0 0.0
      %1160 = vmatprep.subr.mxu0 0.0
      %1161 = vmatpush2.msra.mxu0 0.0
      %1162 = vmatprep.mubr.f32.mxu0 0.0
      %1163 = vmatmul.mubr.f32.gmra.mxu0 %v1051
      %v1164 = vpop.f32.mrf.mxu0
      %v1165 = vadd.f32 %v1048, %v1164
      %v1166 = vpop.f32.mrf.mxu0
      %1167 = vmatprep.mubr.f32.mxu0 0.0
      %1168 = vmatmul.mubr.f32.gmra.mxu0 %v1054
      %v1169 = vpop.f32.mrf.mxu0
      %v1170 = vadd.f32 %v1048, %v1169
      %v1171 = vpop.f32.mrf.mxu0
      %1172 = vmatprep.mubr.f32.mxu0 0.0
      %1173 = vmatmul.mubr.f32.gmra.mxu0 %v1057
      %v1174 = vpop.f32.mrf.mxu0
      %v1175 = vadd.f32 %v1048, %v1174
      %v1176 = vpop.f32.mrf.mxu0
      %1177 = vmatprep.mubr.f32.mxu0 0.0
      %1178 = vmatmul.mubr.f32.gmra.mxu0 %v1060
      %v1179 = vpop.f32.mrf.mxu0
      %v1180 = vadd.f32 %v1048, %v1179
      %v1181 = vpop.f32.mrf.mxu0
      %1182 = vmatprep.mubr.f32.mxu0 0.0
      %1183 = vmatmul.mubr.f32.gmra.mxu0 %v1063
      %v1184 = vpop.f32.mrf.mxu0
      %v1185 = vadd.f32 %v1048, %v1184
      %v1186 = vpop.f32.mrf.mxu0
      %1187 = vmatprep.mubr.f32.mxu0 0.0
      %1188 = vmatmul.mubr.f32.gmra.mxu0 %v1066
      %v1189 = vpop.f32.mrf.mxu0
      %v1190 = vadd.f32 %v1048, %v1189
      %v1191 = vpop.f32.mrf.mxu0
      %1192 = vmatprep.mubr.f32.mxu0 0.0
      %1193 = vmatmul.mubr.f32.gmra.mxu0 %v1069
      %v1194 = vpop.f32.mrf.mxu0
      %v1195 = vadd.f32 %v1048, %v1194
      %v1196 = vpop.f32.mrf.mxu0
      %1197 = vmatprep.mubr.f32.mxu0 0.0
      %1198 = vmatmul.mubr.f32.gmra.mxu0 %v1072
      %v1199 = vpop.f32.mrf.mxu0
      %v1200 = vadd.f32 %v1048, %v1199
      %v1201 = vpop.f32.mrf.mxu0
      %1202 = vmatprep.mubr.f32.mxu0 0.0
      %1203 = vmatmul.mubr.f32.gmra.mxu0 %v1075
      %v1204 = vpop.f32.mrf.mxu0
      %v1205 = vadd.f32 %v1048, %v1204
      %v1206 = vpop.f32.mrf.mxu0
      %1207 = vmatprep.mubr.f32.mxu0 0.0
      %1208 = vmatmul.mubr.f32.gmra.mxu0 %v1078
      %v1209 = vpop.f32.mrf.mxu0
      %v1210 = vadd.f32 %v1048, %v1209
      %v1211 = vpop.f32.mrf.mxu0
      %1212 = vmatprep.mubr.f32.mxu0 0.0
      %1213 = vmatmul.mubr.f32.gmra.mxu0 %v1081
      %v1214 = vpop.f32.mrf.mxu0
      %v1215 = vadd.f32 %v1048, %v1214
      %v1216 = vpop.f32.mrf.mxu0
      %1217 = vmatprep.mubr.f32.mxu0 0.0
      %1218 = vmatmul.mubr.f32.gmra.mxu0 %v1084
      %v1219 = vpop.f32.mrf.mxu0
      %v1220 = vadd.f32 %v1048, %v1219
      %v1221 = vpop.f32.mrf.mxu0
      %1222 = vmatprep.mubr.f32.mxu0 0.0
      %1223 = vmatmul.mubr.f32.gmra.mxu0 %v1087
      %v1224 = vpop.f32.mrf.mxu0
      %v1225 = vadd.f32 %v1048, %v1224
      %v1226 = vpop.f32.mrf.mxu0
      %1227 = vmatprep.mubr.f32.mxu0 0.0
      %1228 = vmatmul.mubr.f32.gmra.mxu0 %v1090
      %v1229 = vpop.f32.mrf.mxu0
      %v1230 = vadd.f32 %v1048, %v1229
      %v1231 = vpop.f32.mrf.mxu0
      %1232 = vmatprep.mubr.f32.mxu0 0.0
      %1233 = vmatmul.mubr.f32.gmra.mxu0 %v1093
      %v1234 = vpop.f32.mrf.mxu0
      %v1235 = vadd.f32 %v1048, %v1234
      %v1236 = vpop.f32.mrf.mxu0
      %1237 = vmatprep.mubr.f32.mxu0 0.0
      %1238 = vmatmul.mubr.f32.gmra.mxu0 %v1096
      %v1239 = vpop.f32.mrf.mxu0
      %v1240 = vadd.f32 %v1048, %v1239
      %v1241 = vpop.f32.mrf.mxu0
      %1242 = vdwg.mxu0
      %v1243 = vmax.f32 %v1165, 0.0
      %v1244 = vmax.f32 %v1170, 0.0
      %v1245 = vmax.f32 %v1175, 0.0
      %v1246 = vmax.f32 %v1180, 0.0
      %v1247 = vmax.f32 %v1185, 0.0
      %v1248 = vmax.f32 %v1190, 0.0
      %v1249 = vmax.f32 %v1195, 0.0
      %v1250 = vmax.f32 %v1200, 0.0
      %v1251 = vmax.f32 %v1205, 0.0
      %v1252 = vmax.f32 %v1210, 0.0
      %v1253 = vmax.f32 %v1215, 0.0
      %v1254 = vmax.f32 %v1220, 0.0
      %v1255 = vmax.f32 %v1225, 0.0
      %v1256 = vmax.f32 %v1230, 0.0
      %v1257 = vmax.f32 %v1235, 0.0
      %v1258 = vmax.f32 %v1240, 0.0
      %v1259 = vld [vmem:[%s2 + $0x100] sm:$0xff]
      %v1260 = vld [vmem:[%s2 + $0x108] sm:$0xff]
      %v1261 = vld [vmem:[%s2 + $0x110] sm:$0xff]
      %v1262 = vld [vmem:[%s2 + $0x118] sm:$0xff]
      %v1263 = vld [vmem:[%s3 + $0x4] sm:$0x1]
      %v1264 = vlaneseq
      %v1265 = vshrl.u32 %v1264, 7
      %v1266 = vsub.s32 0, %v1265
      %v1267 = vrot.slane %v1263, %v1266
      %v1269 = vsel %vm248, %v1243, 0
      %v1272 = vsel %vm248, %v1244, 0
      %v1275 = vsel %vm248, %v1245, 0
      %v1278 = vsel %vm248, %v1246, 0
      %v1281 = vsel %vm248, %v1247, 0
      %v1284 = vsel %vm248, %v1248, 0
      %v1287 = vsel %vm248, %v1249, 0
      %v1290 = vsel %vm248, %v1250, 0
      %v1293 = vsel %vm248, %v1251, 0
      %v1296 = vsel %vm248, %v1252, 0
      %v1299 = vsel %vm248, %v1253, 0
      %v1302 = vsel %vm248, %v1254, 0
      %v1305 = vsel %vm248, %v1255, 0
      %v1308 = vsel %vm248, %v1256, 0
      %v1311 = vsel %vm248, %v1257, 0
      %v1314 = vsel %vm248, %v1258, 0
      %1316 = vmatprep.subr.mxu0 0.0
      %1317 = vmatpush1.msra.mxu0 0.0
      %1318 = vmatprep.subr.mxu0 0.0
      %1319 = vmatpush1.msra.mxu0 0.0
      %1320 = vmatprep.subr.mxu0 0.0
      %1321 = vmatpush1.msra.mxu0 0.0
      %1322 = vmatprep.subr.mxu0 0.0
      %1323 = vmatpush1.msra.mxu0 0.0
      %1324 = vmatprep.subr.mxu0 0.0
      %1325 = vmatpush1.msra.mxu0 0.0
      %1326 = vmatprep.subr.mxu0 0.0
      %1327 = vmatpush1.msra.mxu0 0.0
      %1328 = vmatprep.subr.mxu0 0.0
      %1329 = vmatpush1.msra.mxu0 0.0
      %1330 = vmatprep.subr.mxu0 0.0
      %1331 = vmatpush1.msra.mxu0 0.0
      %1332 = vmatprep.subr.mxu0 0.0
      %1333 = vmatpush1.msra.mxu0 0.0
      %1334 = vmatprep.subr.mxu0 0.0
      %1335 = vmatpush1.msra.mxu0 0.0
      %1336 = vmatprep.subr.mxu0 0.0
      %1337 = vmatpush1.msra.mxu0 0.0
      %1338 = vmatprep.subr.mxu0 0.0
      %1339 = vmatpush1.msra.mxu0 0.0
      %1340 = vmatprep.subr.mxu0 0.0
      %1341 = vmatpush1.msra.mxu0 %v1262
      %1342 = vmatprep.subr.mxu0 0.0
      %1343 = vmatpush1.msra.mxu0 %v1261
      %1344 = vmatprep.subr.mxu0 0.0
      %1345 = vmatpush1.msra.mxu0 %v1260
      %1346 = vmatprep.subr.mxu0 0.0
      %1347 = vmatpush1.msra.mxu0 %v1259
      %1348 = vmatprep.subr.mxu0 0.0
      %1349 = vmatpush2.msra.mxu0 0.0
      %1350 = vmatprep.subr.mxu0 0.0
      %1351 = vmatpush2.msra.mxu0 0.0
      %1352 = vmatprep.subr.mxu0 0.0
      %1353 = vmatpush2.msra.mxu0 0.0
      %1354 = vmatprep.subr.mxu0 0.0
      %1355 = vmatpush2.msra.mxu0 0.0
      %1356 = vmatprep.subr.mxu0 0.0
      %1357 = vmatpush2.msra.mxu0 0.0
      %1358 = vmatprep.subr.mxu0 0.0
      %1359 = vmatpush2.msra.mxu0 0.0
      %1360 = vmatprep.subr.mxu0 0.0
      %1361 = vmatpush2.msra.mxu0 0.0
      %1362 = vmatprep.subr.mxu0 0.0
      %1363 = vmatpush2.msra.mxu0 0.0
      %1364 = vmatprep.subr.mxu0 0.0
      %1365 = vmatpush2.msra.mxu0 0.0
      %1366 = vmatprep.subr.mxu0 0.0
      %1367 = vmatpush2.msra.mxu0 0.0
      %1368 = vmatprep.subr.mxu0 0.0
      %1369 = vmatpush2.msra.mxu0 0.0
      %1370 = vmatprep.subr.mxu0 0.0
      %1371 = vmatpush2.msra.mxu0 0.0
      %1372 = vmatprep.subr.mxu0 0.0
      %1373 = vmatpush2.msra.mxu0 0.0
      %1374 = vmatprep.subr.mxu0 0.0
      %1375 = vmatpush2.msra.mxu0 0.0
      %1376 = vmatprep.subr.mxu0 0.0
      %1377 = vmatpush2.msra.mxu0 0.0
      %1378 = vmatprep.subr.mxu0 0.0
      %1379 = vmatpush2.msra.mxu0 0.0
      %1380 = vmatprep.mubr.f32.mxu0 0.0
      %1381 = vmatmul.mubr.f32.gmra.mxu0 %v1269
      %v1382 = vpop.f32.mrf.mxu0
      %v1383 = vadd.f32 %v1267, %v1382
      %v1384 = vpop.f32.mrf.mxu0
      %1385 = vmatprep.mubr.f32.mxu0 0.0
      %1386 = vmatmul.mubr.f32.gmra.mxu0 %v1272
      %v1387 = vpop.f32.mrf.mxu0
      %v1388 = vadd.f32 %v1267, %v1387
      %v1389 = vpop.f32.mrf.mxu0
      %1390 = vmatprep.mubr.f32.mxu0 0.0
      %1391 = vmatmul.mubr.f32.gmra.mxu0 %v1275
      %v1392 = vpop.f32.mrf.mxu0
      %v1393 = vadd.f32 %v1267, %v1392
      %v1394 = vpop.f32.mrf.mxu0
      %1395 = vmatprep.mubr.f32.mxu0 0.0
      %1396 = vmatmul.mubr.f32.gmra.mxu0 %v1278
      %v1397 = vpop.f32.mrf.mxu0
      %v1398 = vadd.f32 %v1267, %v1397
      %v1399 = vpop.f32.mrf.mxu0
      %1400 = vmatprep.mubr.f32.mxu0 0.0
      %1401 = vmatmul.mubr.f32.gmra.mxu0 %v1281
      %v1402 = vpop.f32.mrf.mxu0
      %v1403 = vadd.f32 %v1267, %v1402
      %v1404 = vpop.f32.mrf.mxu0
      %1405 = vmatprep.mubr.f32.mxu0 0.0
      %1406 = vmatmul.mubr.f32.gmra.mxu0 %v1284
      %v1407 = vpop.f32.mrf.mxu0
      %v1408 = vadd.f32 %v1267, %v1407
      %v1409 = vpop.f32.mrf.mxu0
      %1410 = vmatprep.mubr.f32.mxu0 0.0
      %1411 = vmatmul.mubr.f32.gmra.mxu0 %v1287
      %v1412 = vpop.f32.mrf.mxu0
      %v1413 = vadd.f32 %v1267, %v1412
      %v1414 = vpop.f32.mrf.mxu0
      %1415 = vmatprep.mubr.f32.mxu0 0.0
      %1416 = vmatmul.mubr.f32.gmra.mxu0 %v1290
      %v1417 = vpop.f32.mrf.mxu0
      %v1418 = vadd.f32 %v1267, %v1417
      %v1419 = vpop.f32.mrf.mxu0
      %1420 = vmatprep.mubr.f32.mxu0 0.0
      %1421 = vmatmul.mubr.f32.gmra.mxu0 %v1293
      %v1422 = vpop.f32.mrf.mxu0
      %v1423 = vadd.f32 %v1267, %v1422
      %v1424 = vpop.f32.mrf.mxu0
      %1425 = vmatprep.mubr.f32.mxu0 0.0
      %1426 = vmatmul.mubr.f32.gmra.mxu0 %v1296
      %v1427 = vpop.f32.mrf.mxu0
      %v1428 = vadd.f32 %v1267, %v1427
      %v1429 = vpop.f32.mrf.mxu0
      %1430 = vmatprep.mubr.f32.mxu0 0.0
      %1431 = vmatmul.mubr.f32.gmra.mxu0 %v1299
      %v1432 = vpop.f32.mrf.mxu0
      %v1433 = vadd.f32 %v1267, %v1432
      %v1434 = vpop.f32.mrf.mxu0
      %1435 = vmatprep.mubr.f32.mxu0 0.0
      %1436 = vmatmul.mubr.f32.gmra.mxu0 %v1302
      %v1437 = vpop.f32.mrf.mxu0
      %v1438 = vadd.f32 %v1267, %v1437
      %v1439 = vpop.f32.mrf.mxu0
      %1440 = vmatprep.mubr.f32.mxu0 0.0
      %1441 = vmatmul.mubr.f32.gmra.mxu0 %v1305
      %v1442 = vpop.f32.mrf.mxu0
      %v1443 = vadd.f32 %v1267, %v1442
      %v1444 = vpop.f32.mrf.mxu0
      %1445 = vmatprep.mubr.f32.mxu0 0.0
      %1446 = vmatmul.mubr.f32.gmra.mxu0 %v1308
      %v1447 = vpop.f32.mrf.mxu0
      %v1448 = vadd.f32 %v1267, %v1447
      %v1449 = vpop.f32.mrf.mxu0
      %1450 = vmatprep.mubr.f32.mxu0 0.0
      %1451 = vmatmul.mubr.f32.gmra.mxu0 %v1311
      %v1452 = vpop.f32.mrf.mxu0
      %v1453 = vadd.f32 %v1267, %v1452
      %v1454 = vpop.f32.mrf.mxu0
      %1455 = vmatprep.mubr.f32.mxu0 0.0
      %1456 = vmatmul.mubr.f32.gmra.mxu0 %v1314
      %v1457 = vpop.f32.mrf.mxu0
      %v1458 = vadd.f32 %v1267, %v1457
      %v1459 = vpop.f32.mrf.mxu0
      %1460 = vdwg.mxu0
      %v1461 = vmax.f32 %v1383, 0.0
      %v1462 = vmax.f32 %v1388, 0.0
      %v1463 = vmax.f32 %v1393, 0.0
      %v1464 = vmax.f32 %v1398, 0.0
      %v1465 = vmax.f32 %v1403, 0.0
      %v1466 = vmax.f32 %v1408, 0.0
      %v1467 = vmax.f32 %v1413, 0.0
      %v1468 = vmax.f32 %v1418, 0.0
      %v1469 = vmax.f32 %v1423, 0.0
      %v1470 = vmax.f32 %v1428, 0.0
      %v1471 = vmax.f32 %v1433, 0.0
      %v1472 = vmax.f32 %v1438, 0.0
      %v1473 = vmax.f32 %v1443, 0.0
      %v1474 = vmax.f32 %v1448, 0.0
      %v1475 = vmax.f32 %v1453, 0.0
      %v1476 = vmax.f32 %v1458, 0.0
      %v1477 = vld [vmem:[%s2 + $0x140] sm:$0xff]
      %v1478 = vld [vmem:[%s2 + $0x148] sm:$0xff]
      %v1479 = vld [vmem:[%s2 + $0x150] sm:$0xff]
      %v1480 = vld [vmem:[%s2 + $0x158] sm:$0xff]
      %v1481 = vld [vmem:[%s2 + $0x160] sm:$0xff]
      %v1482 = vld [vmem:[%s2 + $0x168] sm:$0xff]
      %v1483 = vld [vmem:[%s2 + $0x170] sm:$0xff]
      %v1484 = vld [vmem:[%s2 + $0x178] sm:$0xff]
      %v1485 = vld [vmem:[%s3 + $0x5] sm:$0x1]
      %v1486 = vlaneseq
      %v1487 = vshrl.u32 %v1486, 7
      %v1488 = vsub.s32 0, %v1487
      %v1489 = vrot.slane %v1485, %v1488
      %v1491 = vsel %vm471, %v1461, 0
      %v1494 = vsel %vm471, %v1462, 0
      %v1497 = vsel %vm471, %v1463, 0
      %v1500 = vsel %vm471, %v1464, 0
      %v1503 = vsel %vm471, %v1465, 0
      %v1506 = vsel %vm471, %v1466, 0
      %v1509 = vsel %vm471, %v1467, 0
      %v1512 = vsel %vm471, %v1468, 0
      %v1515 = vsel %vm471, %v1469, 0
      %v1518 = vsel %vm471, %v1470, 0
      %v1521 = vsel %vm471, %v1471, 0
      %v1524 = vsel %vm471, %v1472, 0
      %v1527 = vsel %vm471, %v1473, 0
      %v1530 = vsel %vm471, %v1474, 0
      %v1533 = vsel %vm471, %v1475, 0
      %v1536 = vsel %vm471, %v1476, 0
      %1538 = vmatprep.subr.mxu0 0.0
      %1539 = vmatpush1.msra.mxu0 0.0
      %1540 = vmatprep.subr.mxu0 0.0
      %1541 = vmatpush1.msra.mxu0 0.0
      %1542 = vmatprep.subr.mxu0 0.0
      %1543 = vmatpush1.msra.mxu0 0.0
      %1544 = vmatprep.subr.mxu0 0.0
      %1545 = vmatpush1.msra.mxu0 0.0
      %1546 = vmatprep.subr.mxu0 0.0
      %1547 = vmatpush1.msra.mxu0 0.0
      %1548 = vmatprep.subr.mxu0 0.0
      %1549 = vmatpush1.msra.mxu0 0.0
      %1550 = vmatprep.subr.mxu0 0.0
      %1551 = vmatpush1.msra.mxu0 0.0
      %1552 = vmatprep.subr.mxu0 0.0
      %1553 = vmatpush1.msra.mxu0 0.0
      %1554 = vmatprep.subr.mxu0 0.0
      %1555 = vmatpush1.msra.mxu0 %v1484
      %1556 = vmatprep.subr.mxu0 0.0
      %1557 = vmatpush1.msra.mxu0 %v1483
      %1558 = vmatprep.subr.mxu0 0.0
      %1559 = vmatpush1.msra.mxu0 %v1482
      %1560 = vmatprep.subr.mxu0 0.0
      %1561 = vmatpush1.msra.mxu0 %v1481
      %1562 = vmatprep.subr.mxu0 0.0
      %1563 = vmatpush1.msra.mxu0 %v1480
      %1564 = vmatprep.subr.mxu0 0.0
      %1565 = vmatpush1.msra.mxu0 %v1479
      %1566 = vmatprep.subr.mxu0 0.0
      %1567 = vmatpush1.msra.mxu0 %v1478
      %1568 = vmatprep.subr.mxu0 0.0
      %1569 = vmatpush1.msra.mxu0 %v1477
      %1570 = vmatprep.subr.mxu0 0.0
      %1571 = vmatpush2.msra.mxu0 0.0
      %1572 = vmatprep.subr.mxu0 0.0
      %1573 = vmatpush2.msra.mxu0 0.0
      %1574 = vmatprep.subr.mxu0 0.0
      %1575 = vmatpush2.msra.mxu0 0.0
      %1576 = vmatprep.subr.mxu0 0.0
      %1577 = vmatpush2.msra.mxu0 0.0
      %1578 = vmatprep.subr.mxu0 0.0
      %1579 = vmatpush2.msra.mxu0 0.0
      %1580 = vmatprep.subr.mxu0 0.0
      %1581 = vmatpush2.msra.mxu0 0.0
      %1582 = vmatprep.subr.mxu0 0.0
      %1583 = vmatpush2.msra.mxu0 0.0
      %1584 = vmatprep.subr.mxu0 0.0
      %1585 = vmatpush2.msra.mxu0 0.0
      %1586 = vmatprep.subr.mxu0 0.0
      %1587 = vmatpush2.msra.mxu0 0.0
      %1588 = vmatprep.subr.mxu0 0.0
      %1589 = vmatpush2.msra.mxu0 0.0
      %1590 = vmatprep.subr.mxu0 0.0
      %1591 = vmatpush2.msra.mxu0 0.0
      %1592 = vmatprep.subr.mxu0 0.0
      %1593 = vmatpush2.msra.mxu0 0.0
      %1594 = vmatprep.subr.mxu0 0.0
      %1595 = vmatpush2.msra.mxu0 0.0
      %1596 = vmatprep.subr.mxu0 0.0
      %1597 = vmatpush2.msra.mxu0 0.0
      %1598 = vmatprep.subr.mxu0 0.0
      %1599 = vmatpush2.msra.mxu0 0.0
      %1600 = vmatprep.subr.mxu0 0.0
      %1601 = vmatpush2.msra.mxu0 0.0
      %1602 = vmatprep.mubr.f32.mxu0 0.0
      %1603 = vmatmul.mubr.f32.gmra.mxu0 %v1491
      %v1604 = vpop.f32.mrf.mxu0
      %v1605 = vadd.f32 %v1489, %v1604
      %v1606 = vpop.f32.mrf.mxu0
      %1607 = vmatprep.mubr.f32.mxu0 0.0
      %1608 = vmatmul.mubr.f32.gmra.mxu0 %v1494
      %v1609 = vpop.f32.mrf.mxu0
      %v1610 = vadd.f32 %v1489, %v1609
      %v1611 = vpop.f32.mrf.mxu0
      %1612 = vmatprep.mubr.f32.mxu0 0.0
      %1613 = vmatmul.mubr.f32.gmra.mxu0 %v1497
      %v1614 = vpop.f32.mrf.mxu0
      %v1615 = vadd.f32 %v1489, %v1614
      %v1616 = vpop.f32.mrf.mxu0
      %1617 = vmatprep.mubr.f32.mxu0 0.0
      %1618 = vmatmul.mubr.f32.gmra.mxu0 %v1500
      %v1619 = vpop.f32.mrf.mxu0
      %v1620 = vadd.f32 %v1489, %v1619
      %v1621 = vpop.f32.mrf.mxu0
      %1622 = vmatprep.mubr.f32.mxu0 0.0
      %1623 = vmatmul.mubr.f32.gmra.mxu0 %v1503
      %v1624 = vpop.f32.mrf.mxu0
      %v1625 = vadd.f32 %v1489, %v1624
      %v1626 = vpop.f32.mrf.mxu0
      %1627 = vmatprep.mubr.f32.mxu0 0.0
      %1628 = vmatmul.mubr.f32.gmra.mxu0 %v1506
      %v1629 = vpop.f32.mrf.mxu0
      %v1630 = vadd.f32 %v1489, %v1629
      %v1631 = vpop.f32.mrf.mxu0
      %1632 = vmatprep.mubr.f32.mxu0 0.0
      %1633 = vmatmul.mubr.f32.gmra.mxu0 %v1509
      %v1634 = vpop.f32.mrf.mxu0
      %v1635 = vadd.f32 %v1489, %v1634
      %v1636 = vpop.f32.mrf.mxu0
      %1637 = vmatprep.mubr.f32.mxu0 0.0
      %1638 = vmatmul.mubr.f32.gmra.mxu0 %v1512
      %v1639 = vpop.f32.mrf.mxu0
      %v1640 = vadd.f32 %v1489, %v1639
      %v1641 = vpop.f32.mrf.mxu0
      %1642 = vmatprep.mubr.f32.mxu0 0.0
      %1643 = vmatmul.mubr.f32.gmra.mxu0 %v1515
      %v1644 = vpop.f32.mrf.mxu0
      %v1645 = vadd.f32 %v1489, %v1644
      %v1646 = vpop.f32.mrf.mxu0
      %1647 = vmatprep.mubr.f32.mxu0 0.0
      %1648 = vmatmul.mubr.f32.gmra.mxu0 %v1518
      %v1649 = vpop.f32.mrf.mxu0
      %v1650 = vadd.f32 %v1489, %v1649
      %v1651 = vpop.f32.mrf.mxu0
      %1652 = vmatprep.mubr.f32.mxu0 0.0
      %1653 = vmatmul.mubr.f32.gmra.mxu0 %v1521
      %v1654 = vpop.f32.mrf.mxu0
      %v1655 = vadd.f32 %v1489, %v1654
      %v1656 = vpop.f32.mrf.mxu0
      %1657 = vmatprep.mubr.f32.mxu0 0.0
      %1658 = vmatmul.mubr.f32.gmra.mxu0 %v1524
      %v1659 = vpop.f32.mrf.mxu0
      %v1660 = vadd.f32 %v1489, %v1659
      %v1661 = vpop.f32.mrf.mxu0
      %1662 = vmatprep.mubr.f32.mxu0 0.0
      %1663 = vmatmul.mubr.f32.gmra.mxu0 %v1527
      %v1664 = vpop.f32.mrf.mxu0
      %v1665 = vadd.f32 %v1489, %v1664
      %v1666 = vpop.f32.mrf.mxu0
      %1667 = vmatprep.mubr.f32.mxu0 0.0
      %1668 = vmatmul.mubr.f32.gmra.mxu0 %v1530
      %v1669 = vpop.f32.mrf.mxu0
      %v1670 = vadd.f32 %v1489, %v1669
      %v1671 = vpop.f32.mrf.mxu0
      %1672 = vmatprep.mubr.f32.mxu0 0.0
      %1673 = vmatmul.mubr.f32.gmra.mxu0 %v1533
      %v1674 = vpop.f32.mrf.mxu0
      %v1675 = vadd.f32 %v1489, %v1674
      %v1676 = vpop.f32.mrf.mxu0
      %1677 = vmatprep.mubr.f32.mxu0 0.0
      %1678 = vmatmul.mubr.f32.gmra.mxu0 %v1536
      %v1679 = vpop.f32.mrf.mxu0
      %v1680 = vadd.f32 %v1489, %v1679
      %v1681 = vpop.f32.mrf.mxu0
      %1682 = vdwg.mxu0
      %1699 = vrot.lane.b32.xlu0 %v805, 32
      %v1700 = vpop.permute.xlu0 %1699
      %1701 = vrot.lane.b32.xlu0 %v810, 32
      %v1702 = vpop.permute.xlu0 %1701
      %1703 = vrot.lane.b32.xlu0 %v815, 32
      %v1704 = vpop.permute.xlu0 %1703
      %1705 = vrot.lane.b32.xlu0 %v820, 32
      %v1706 = vpop.permute.xlu0 %1705
      %1707 = vrot.lane.b32.xlu0 %v825, 32
      %v1708 = vpop.permute.xlu0 %1707
      %1709 = vrot.lane.b32.xlu0 %v830, 32
      %v1710 = vpop.permute.xlu0 %1709
      %1711 = vrot.lane.b32.xlu0 %v835, 32
      %v1712 = vpop.permute.xlu0 %1711
      %1713 = vrot.lane.b32.xlu0 %v840, 32
      %v1714 = vpop.permute.xlu0 %1713
      %1715 = vrot.lane.b32.xlu0 %v845, 32
      %v1716 = vpop.permute.xlu0 %1715
      %1717 = vrot.lane.b32.xlu0 %v850, 32
      %v1718 = vpop.permute.xlu0 %1717
      %1719 = vrot.lane.b32.xlu0 %v855, 32
      %v1720 = vpop.permute.xlu0 %1719
      %1721 = vrot.lane.b32.xlu0 %v860, 32
      %v1722 = vpop.permute.xlu0 %1721
      %1723 = vrot.lane.b32.xlu0 %v865, 32
      %v1724 = vpop.permute.xlu0 %1723
      %1725 = vrot.lane.b32.xlu0 %v870, 32
      %v1726 = vpop.permute.xlu0 %1725
      %1727 = vrot.lane.b32.xlu0 %v875, 32
      %v1728 = vpop.permute.xlu0 %1727
      %1729 = vrot.lane.b32.xlu0 %v880, 32
      %v1730 = vpop.permute.xlu0 %1729
      %v1747 = vsel %vm248, %v1605, %v1700
      %v1748 = vsel %vm248, %v1610, %v1702
      %v1749 = vsel %vm248, %v1615, %v1704
      %v1750 = vsel %vm248, %v1620, %v1706
      %v1751 = vsel %vm248, %v1625, %v1708
      %v1752 = vsel %vm248, %v1630, %v1710
      %v1753 = vsel %vm248, %v1635, %v1712
      %v1754 = vsel %vm248, %v1640, %v1714
      %v1755 = vsel %vm248, %v1645, %v1716
      %v1756 = vsel %vm248, %v1650, %v1718
      %v1757 = vsel %vm248, %v1655, %v1720
      %v1758 = vsel %vm248, %v1660, %v1722
      %v1759 = vsel %vm248, %v1665, %v1724
      %v1760 = vsel %vm248, %v1670, %v1726
      %v1761 = vsel %vm248, %v1675, %v1728
      %v1762 = vsel %vm248, %v1680, %v1730
      %vm1763 = vcmask 326656
      %v1764 = vsel %vm1763, %v1747, %v1700
      %v1765 = vsel %vm1763, %v1748, %v1702
      %v1766 = vsel %vm1763, %v1749, %v1704
      %v1767 = vsel %vm1763, %v1750, %v1706
      %v1768 = vsel %vm1763, %v1751, %v1708
      %v1769 = vsel %vm1763, %v1752, %v1710
      %v1770 = vsel %vm1763, %v1753, %v1712
      %v1771 = vsel %vm1763, %v1754, %v1714
      %v1772 = vsel %vm1763, %v1755, %v1716
      %v1773 = vsel %vm1763, %v1756, %v1718
      %v1774 = vsel %vm1763, %v1757, %v1720
      %v1775 = vsel %vm1763, %v1758, %v1722
      %v1776 = vsel %vm1763, %v1759, %v1724
      %v1777 = vsel %vm1763, %v1760, %v1726
      %v1778 = vsel %vm1763, %v1761, %v1728
      %v1779 = vsel %vm1763, %v1762, %v1730
      %vm1780 = vcmask 392192
      %1781 = vst.msk [vmem:[%s221] sm:$0xff] %vm1780, %v1764
      %1782 = vst.msk [vmem:[%s221 + $0x8] sm:$0xff] %vm1780, %v1765
      %1783 = vst.msk [vmem:[%s221 + $0x10] sm:$0xff] %vm1780, %v1766
      %1784 = vst.msk [vmem:[%s221 + $0x18] sm:$0xff] %vm1780, %v1767
      %1785 = vst.msk [vmem:[%s221 + $0x20] sm:$0xff] %vm1780, %v1768
      %1786 = vst.msk [vmem:[%s221 + $0x28] sm:$0xff] %vm1780, %v1769
      %1787 = vst.msk [vmem:[%s221 + $0x30] sm:$0xff] %vm1780, %v1770
      %1788 = vst.msk [vmem:[%s221 + $0x38] sm:$0xff] %vm1780, %v1771
      %1789 = vst.msk [vmem:[%s221 + $0x40] sm:$0xff] %vm1780, %v1772
      %1790 = vst.msk [vmem:[%s221 + $0x48] sm:$0xff] %vm1780, %v1773
      %1791 = vst.msk [vmem:[%s221 + $0x50] sm:$0xff] %vm1780, %v1774
      %1792 = vst.msk [vmem:[%s221 + $0x58] sm:$0xff] %vm1780, %v1775
      %1793 = vst.msk [vmem:[%s221 + $0x60] sm:$0xff] %vm1780, %v1776
      %1794 = vst.msk [vmem:[%s221 + $0x68] sm:$0xff] %vm1780, %v1777
      %1795 = vst.msk [vmem:[%s221 + $0x70] sm:$0xff] %vm1780, %v1778
      %1796 = vst.msk [vmem:[%s221 + $0x78] sm:$0xff] %vm1780, %v1779
      %s1797 = smul.u32 16, %s15
      %p1798 = scmp.lt.s32.totalorder %s1797, 31
      %s1799 = scalar_select %p1798, %s1797, 31
      %s1800 = smul.addr %s1799, 8
      %s1801 = scalar_lea.vmem %s4, %s1800
      // Predicated region
      $region37: #{vae_forward.1} parent=35 // pred_check
        %p1802 = pneg %p127
      $region38: #{vae_forward.1} parent=35 // pred_check_branch
        %1804 = sbr.rel (%p1802) target = $region40
      $region39: #{vae_forward.1} parent=35 // pred_region
        %s1805 = smul.u32 16, %s15
      $region40: #{vae_forward.1} parent=35 // pred_fallthru
        _
    $region36: #{vae_forward.1} parent=5 // pred_fallthru
      _
    %p1806 = scmp.le.s32.totalorder 2, %s10
    // Predicated region
    $region41: #{vae_forward.1} parent=5 // pred_check
      %p1807 = pneg %p1806
    $region42: #{vae_forward.1} parent=5 // pred_check_branch
      %1809 = sbr.rel (%p1807) target = $region44
    $region43: #{vae_forward.1} parent=5 // pred_region
      %s1810 = ssub.s32 %s10, 2
      // Predicated region
      $region45: #{vae_forward.1} parent=43 // pred_check
        %p1811 = pneg %p133
      $region46: #{vae_forward.1} parent=43 // pred_check_branch
        %1813 = sbr.rel (%p1811) target = $region48
      $region47: #{vae_forward.1} parent=43 // pred_region
        %s1814 = smul.u32 16, %s16
        %p1815 = scmp.lt.s32.totalorder %s1814, 31
        %s1816 = scalar_select %p1815, %s1814, 31
        %s1817 = smul.addr %s1816, 8
        %s1818 = scalar_lea.vmem %s4, %s1817
      $region48: #{vae_forward.1} parent=43 // pred_fallthru
        _
    $region44: #{vae_forward.1} parent=5 // pred_fallthru
      _
  $region6: #{vae_forward.1} parent=0 // loop_footer
    %s14 = sadd.s32 1, %s10
  $region7: #{vae_forward.1} parent=0 // loop_footer_branch
    %9 = sbr.rel target = $region3
  $region8: #{vae_forward.1} parent=0 // loop_exit
    _

</llo_original>
